<compile_context>
chip_gen: v7x
topology: tpu7x:2x2x1
jax: 0.10.0
libtpu: 0.0.40
codegen_flags: <defaults>
</compile_context>

<pallas_src>
import functools

import jax
import jax.numpy as jnp
from jax.experimental import pallas as pl
from jax.experimental.pallas import tpu as pltpu


# ----------------------------------------------------------------------------- kernel
def fused_cheb_gcn_kernel(*refs, n_layers, Ks, B, Nd_last, F_last):
    """Entire forward pass, whole batch, one grid step.

    Ref layout (all 2-D, activations batch-major with row index b*N + n):
      inputs : x2 (B*N0, F0)
               per layer i: LB_i (B*N_i, B*N_i)      block-diag scaled Laplacian
                            Wc_i (K_i*Fin_i, Fout_i) concatenated Chebyshev weights
                            b_i  (1, Fout_i)
                            DB_i (B*Nd_i, B*N_i)     block-diag pooling matrix
               enc_w (Nd_last*F_last, H), enc_b (1, H), cls_w (H, Z), cls_b (1, Z)
      outputs: o (B, Z)
      scratch: per layer i: basis_i (B*N_i, K_i*Fin_i)
               hs (B*Nd_last, F_last), flat (B, Nd_last*F_last)
    """
    f32 = jnp.float32

    # --- unpack refs -------------------------------------------------------------
    idx = 0
    x_ref = refs[idx]; idx += 1
    layer_refs = []
    for _ in range(n_layers):
        layer_refs.append(refs[idx:idx + 4]); idx += 4
    encw_ref, encb_ref, clsw_ref, clsb_ref = refs[idx:idx + 4]; idx += 4
    o_ref = refs[idx]; idx += 1
    basis_refs = refs[idx:idx + n_layers]; idx += n_layers
    hs_ref = refs[idx]
    flat_ref = refs[idx + 1]

    # --- ChebConv layers: recursion -> single matmul -> bias -> ReLU -> Pool ------
    h = x_ref[...]                                             # (B*N0, F0)
    for i in range(n_layers):
        LB_ref, Wc_ref, b_ref, DB_ref = layer_refs[i]
        basis_ref = basis_refs[i]
        K = Ks[i]
        Fin = h.shape[-1]
        LB = LB_ref[...]                                       # kron(I_B, L_hat)

        # Chebyshev basis [T0 | T1 | ... | T_{K-1}] assembled in VMEM scratch.
        # T0 = x, T1 = L x, Tk = 2 L T_{k-1} - T_{k-2}
        basis_ref[:, 0:Fin] = h
        if K > 1:
            t_pp = h
            t_p = jnp.dot(LB, h, preferred_element_type=f32)
            basis_ref[:, Fin:2 * Fin] = t_p
            for k in range(2, K):
                t_k = 2.0 * jnp.dot(LB, t_p, preferred_element_type=f32) - t_pp
                basis_ref[:, k * Fin:(k + 1) * Fin] = t_k
                t_pp, t_p = t_p, t_k

        # One MXU contraction over (k, Fin), then bias + ReLU + fused Pool matmul.
        out = jnp.dot(basis_ref[...], Wc_ref[...], preferred_element_type=f32)
        out = jnp.maximum(out + b_ref[...], 0.0)
        h = jnp.dot(DB_ref[...], out, preferred_element_type=f32)   # (B*Nd_i, Fout_i)

    # --- flatten (b, nd, f) -> (b, nd*F_last), torch row-major reshape semantics --
    hs_ref[...] = h
    for b in range(B):
        for nd in range(Nd_last):
            flat_ref[b:b + 1, nd * F_last:(nd + 1) * F_last] = (
                hs_ref[b * Nd_last + nd:b * Nd_last + nd + 1, :])

    # --- MLP head: cls_layer(relu(enc_lin(flat))) ----------------------------------
    e = jnp.dot(flat_ref[...], encw_ref[...], preferred_element_type=f32) + encb_ref[...]
    e = jnp.maximum(e, 0.0)
    o_ref[...] = jnp.dot(e, clsw_ref[...], preferred_element_type=f32) + clsb_ref[...]


# ----------------------------------------------------------------------------- wrapper
def cheb_gcn_forward(x, params):
    B = x.shape[0]
    F0 = params["num_feature"]
    layers = params["layers"]
    n_layers = len(layers)
    Ks = tuple(int(l["W"].shape[0]) for l in layers)
    Nd_last = int(layers[-1]["D"].shape[0])
    F_last = int(layers[-1]["W"].shape[2])
    Z = int(params["cls_w"].shape[1])

    eyeB = jnp.eye(B, dtype=jnp.float32)
    x2 = x.reshape(-1, F0)                                    # (B*N0, F0), batch-major

    operands = [x2]
    scratch = []
    for l in layers:
        L, W, b, D = l["L"], l["W"], l["b"], l["D"]
        K, Fin, Fout = W.shape
        N = L.shape[0]
        operands += [
            jnp.kron(eyeB, L),                 # (B*N, B*N) block-diag scaled Laplacian
            W.reshape(K * Fin, Fout),          # [W_0; W_1; ...; W_{K-1}]
            b,                                 # (1, Fout)
            jnp.kron(eyeB, D),                 # (B*Nd, B*N) block-diag pooling
        ]
        scratch.append(pltpu.VMEM((B * N, K * Fin), jnp.float32))
    operands += [params["enc_w"], params["enc_b"], params["cls_w"], params["cls_b"]]
    scratch += [
        pltpu.VMEM((B * Nd_last, F_last), jnp.float32),       # pooled activations
        pltpu.VMEM((B, Nd_last * F_last), jnp.float32),       # flattened head input
    ]

    in_specs = [pl.BlockSpec(op.shape, lambda i: (0, 0)) for op in operands]

    kernel = functools.partial(
        fused_cheb_gcn_kernel, n_layers=n_layers, Ks=Ks, B=B,
        Nd_last=Nd_last, F_last=F_last)

    return pl.pallas_call(
        kernel,
        out_shape=jax.ShapeDtypeStruct((B, Z), jnp.float32),
        grid=(1,),
        in_specs=in_specs,
        out_specs=pl.BlockSpec((B, Z), lambda i: (0, 0)),
        scratch_shapes=scratch,
        compiler_params=pltpu.CompilerParams(dimension_semantics=("arbitrary",)),
    )(*operands)


# ------------------------------------------------------------------------------- glue
def scaled_laplacian(A):
    """ChebConv 'sym' normalization with lambda_max=2 and self-loops removed:
    L_hat = 2*(I - D^-1/2 A D^-1/2)/lambda_max - I = -D^-1/2 A D^-1/2 (zero diagonal)."""
    deg = A.sum(axis=1)
    dinv = jnp.where(deg > 0, 1.0 / jnp.sqrt(deg), 0.0)
    return -(dinv[:, None] * A * dinv[None, :])


def make_adjacency(key, n, p=0.3):
    m = (jax.random.uniform(key, (n, n)) < p).astype(jnp.float32)
    m = jnp.triu(m, 1)
    a = m + m.T
    idx = jnp.arange(n)
    ring = jnp.zeros((n, n), jnp.float32).at[idx, (idx + 1) % n].set(1.0)
    return jnp.clip(a + ring + ring.T, 0.0, 1.0)   # symmetric, zero diagonal


def make_downsample(n):
    """Average-pool pairs of nodes: D is (n//2, n), D[i, 2i] = D[i, 2i+1] = 0.5."""
    nd = n // 2
    i = jnp.arange(nd)
    D = jnp.zeros((nd, n), jnp.float32)
    D = D.at[i, 2 * i].set(0.5)
    D = D.at[i, 2 * i + 1].set(0.5)
    return D


def ref_forward(x, params):
    """Pure-JAX reference of the same math (sanity check)."""
    B = x.shape[0]
    h = x.reshape(B, -1, params["num_feature"])
    for layer in params["layers"]:
        L, W, b, D = layer["L"], layer["W"], layer["b"], layer["D"]
        K = W.shape[0]
        out = jnp.einsum("bnf,fo->bno", h, W[0])
        if K > 1:
            t1 = jnp.einsum("nm,bmf->bnf", L, h)
            out = out + jnp.einsum("bnf,fo->bno", t1, W[1])
            tpp, tp = h, t1
            for k in range(2, K):
                tk = 2.0 * jnp.einsum("nm,bmf->bnf", L, tp) - tpp
                out = out + jnp.einsum("bnf,fo->bno", tk, W[k])
                tpp, tp = tp, tk
        out = jax.nn.relu(out + b)
        h = jnp.einsum("dn,bno->bdo", D, out)
    h = h.reshape(B, -1)
    h = jax.nn.relu(h @ params["enc_w"] + params["enc_b"])
    return h @ params["cls_w"] + params["cls_b"]


# ------------------------------------------------------------------------------- main
if __name__ == "__main__":
    key = jax.random.PRNGKey(0)

    # Config mirroring cheb_GCN.__init__:
    #   num_feature=3, num_conv_filters=[16, 32, 32] -> filters=[3,16,32,32]
    #   n_layers=2, K (polygon_order)=[3,3], num_classes=4
    #   num_nodes=[32,16], downsample: 32->16, 16->8
    num_feature = 3
    filters = [3, 16, 32, 32]
    K_orders = [3, 3]
    num_classes = 4
    num_nodes = [32, 16]
    n_layers = 2
    batch = 2

    keys = jax.random.split(key, 16)
    layers = []
    for i in range(n_layers):
        n = num_nodes[i]
        A = make_adjacency(keys[i], n)
        L = scaled_laplacian(A)
        fin, fout, K = filters[i], filters[i + 1], K_orders[i]
        glorot = jnp.sqrt(2.0 / (fin + fout))
        W = glorot * jax.random.normal(keys[4 + i], (K, fin, fout), jnp.float32)
        b = jnp.zeros((1, fout), jnp.float32)
        D = make_downsample(n)
        layers.append({"L": L, "W": W, "b": b, "D": D})

    enc_in = (num_nodes[-1] // 2) * filters[-2]   # downsample_matrices[-1].shape[0] * filters[-2]
    enc_w = 0.1 * jax.random.normal(keys[8], (enc_in, 128), jnp.float32)   # normal_(0, 0.1)
    enc_b = jnp.zeros((1, 128), jnp.float32)
    cls_w = 0.1 * jax.random.normal(keys[9], (128, num_classes), jnp.float32)
    cls_b = jnp.zeros((1, num_classes), jnp.float32)

    params = {
        "num_feature": num_feature,
        "layers": layers,
        "enc_w": enc_w, "enc_b": enc_b,
        "cls_w": cls_w, "cls_b": cls_b,
    }

    # Input: flattened mesh features, reshaped to (batch, N0, num_feature) in forward.
    x = jax.random.normal(keys[10], (batch, num_nodes[0] * num_feature), jnp.float32)

    out = cheb_gcn_forward(x, params)
    out = jax.block_until_ready(out)
    assert out.shape == (batch, num_classes), out.shape

    ref = jax.block_until_ready(ref_forward(x, params))
    assert jnp.allclose(out, ref, rtol=1e-3, atol=1e-3), (out, ref)

    print("KERNEL_OK")
</pallas_src>

<mosaic_0001>
module attributes {stable_mosaic.version = 11 : i64} {
  func.func @fused_cheb_gcn_kernel(%arg0: i32, %arg1: memref<64x3xf32, #tpu.memory_space<vmem>>, %arg2: memref<64x64xf32, #tpu.memory_space<vmem>>, %arg3: memref<9x16xf32, #tpu.memory_space<vmem>>, %arg4: memref<1x16xf32, #tpu.memory_space<vmem>>, %arg5: memref<32x64xf32, #tpu.memory_space<vmem>>, %arg6: memref<32x32xf32, #tpu.memory_space<vmem>>, %arg7: memref<48x32xf32, #tpu.memory_space<vmem>>, %arg8: memref<1x32xf32, #tpu.memory_space<vmem>>, %arg9: memref<16x32xf32, #tpu.memory_space<vmem>>, %arg10: memref<256x128xf32, #tpu.memory_space<vmem>>, %arg11: memref<1x128xf32, #tpu.memory_space<vmem>>, %arg12: memref<128x4xf32, #tpu.memory_space<vmem>>, %arg13: memref<1x4xf32, #tpu.memory_space<vmem>>, %arg14: memref<2x4xf32, #tpu.memory_space<vmem>>, %arg15: memref<64x9xf32, #tpu.memory_space<vmem>>, %arg16: memref<32x48xf32, #tpu.memory_space<vmem>>, %arg17: memref<16x32xf32, #tpu.memory_space<vmem>>, %arg18: memref<2x256xf32, #tpu.memory_space<vmem>>) attributes {dimension_semantics = [#tpu.dimension_semantics<arbitrary>], iteration_bounds = array<i64: 1>, scalar_prefetch = 0 : i64, scratch_operands = 4 : i64, tpu.core_type = #tpu.core_type<tc>, window_params = [{pipeline_mode = #tpu.pipeline_mode<synchronous>, transform_indices = @transform_0, window_bounds = array<i64: 64, 3>}, {pipeline_mode = #tpu.pipeline_mode<synchronous>, transform_indices = @transform_1, window_bounds = array<i64: 64, 64>}, {pipeline_mode = #tpu.pipeline_mode<synchronous>, transform_indices = @transform_2, window_bounds = array<i64: 9, 16>}, {pipeline_mode = #tpu.pipeline_mode<synchronous>, transform_indices = @transform_3, window_bounds = array<i64: 1, 16>}, {pipeline_mode = #tpu.pipeline_mode<synchronous>, transform_indices = @transform_4, window_bounds = array<i64: 32, 64>}, {pipeline_mode = #tpu.pipeline_mode<synchronous>, transform_indices = @transform_5, window_bounds = array<i64: 32, 32>}, {pipeline_mode = #tpu.pipeline_mode<synchronous>, transform_indices = @transform_6, window_bounds = array<i64: 48, 32>}, {pipeline_mode = #tpu.pipeline_mode<synchronous>, transform_indices = @transform_7, window_bounds = array<i64: 1, 32>}, {pipeline_mode = #tpu.pipeline_mode<synchronous>, transform_indices = @transform_8, window_bounds = array<i64: 16, 32>}, {pipeline_mode = #tpu.pipeline_mode<synchronous>, transform_indices = @transform_9, window_bounds = array<i64: 256, 128>}, {pipeline_mode = #tpu.pipeline_mode<synchronous>, transform_indices = @transform_10, window_bounds = array<i64: 1, 128>}, {pipeline_mode = #tpu.pipeline_mode<synchronous>, transform_indices = @transform_11, window_bounds = array<i64: 128, 4>}, {pipeline_mode = #tpu.pipeline_mode<synchronous>, transform_indices = @transform_12, window_bounds = array<i64: 1, 4>}, {pipeline_mode = #tpu.pipeline_mode<synchronous>, transform_indices = @transform_13, window_bounds = array<i64: 2, 4>}]} {
    %c0 = arith.constant 0 : index
    %c0_0 = arith.constant 0 : index
    %0 = vector.load %arg1[%c0, %c0_0] : memref<64x3xf32, #tpu.memory_space<vmem>>, vector<64x3xf32>
    %c0_1 = arith.constant 0 : index
    %c0_2 = arith.constant 0 : index
    %1 = vector.load %arg2[%c0_1, %c0_2] : memref<64x64xf32, #tpu.memory_space<vmem>>, vector<64x64xf32>
    %c0_3 = arith.constant 0 : index
    %c0_4 = arith.constant 0 : index
    %2 = vector.load %arg15[%c0_3, %c0_4] : memref<64x9xf32, #tpu.memory_space<vmem>>, vector<64x3xf32>
    tpu.vector_store %arg15[%c0_3, %c0_4], %0 {strides = array<i32>} : memref<64x9xf32, #tpu.memory_space<vmem>>, vector<64x3xf32>,
    %cst = arith.constant dense<0.000000e+00> : vector<64x3xf32>
    %3 = tpu.matmul %1, %0, %cst {dimension_numbers = #tpu.dot_dimension_numbers<[1], [0], [0], [1], [0, 0, 1, 1], [], []>} : vector<64x64xf32>, vector<64x3xf32>, vector<64x3xf32> -> vector<64x3xf32>
    %c0_5 = arith.constant 0 : index
    %c3 = arith.constant 3 : index
    %4 = vector.load %arg15[%c0_5, %c3] : memref<64x9xf32, #tpu.memory_space<vmem>>, vector<64x3xf32>
    tpu.vector_store %arg15[%c0_5, %c3], %3 {strides = array<i32>} : memref<64x9xf32, #tpu.memory_space<vmem>>, vector<64x3xf32>,
    %cst_6 = arith.constant dense<0.000000e+00> : vector<64x3xf32>
    %5 = tpu.matmul %1, %3, %cst_6 {dimension_numbers = #tpu.dot_dimension_numbers<[1], [0], [0], [1], [0, 0, 1, 1], [], []>} : vector<64x64xf32>, vector<64x3xf32>, vector<64x3xf32> -> vector<64x3xf32>
    %cst_7 = arith.constant 2.000000e+00 : f32
    %6 = vector.broadcast %cst_7 : f32 to vector<64x3xf32>
    %7 = arith.mulf %6, %5 : vector<64x3xf32>
    %8 = arith.subf %7, %0 : vector<64x3xf32>
    %c0_8 = arith.constant 0 : index
    %c6 = arith.constant 6 : index
    %9 = vector.load %arg15[%c0_8, %c6] : memref<64x9xf32, #tpu.memory_space<vmem>>, vector<64x3xf32>
    tpu.vector_store %arg15[%c0_8, %c6], %8 {strides = array<i32>} : memref<64x9xf32, #tpu.memory_space<vmem>>, vector<64x3xf32>,
    %c0_9 = arith.constant 0 : index
    %c0_10 = arith.constant 0 : index
    %10 = vector.load %arg15[%c0_9, %c0_10] : memref<64x9xf32, #tpu.memory_space<vmem>>, vector<64x9xf32>
    %c0_11 = arith.constant 0 : index
    %c0_12 = arith.constant 0 : index
    %11 = vector.load %arg3[%c0_11, %c0_12] : memref<9x16xf32, #tpu.memory_space<vmem>>, vector<9x16xf32>
    %cst_13 = arith.constant dense<0.000000e+00> : vector<64x16xf32>
    %12 = tpu.matmul %10, %11, %cst_13 {dimension_numbers = #tpu.dot_dimension_numbers<[1], [0], [0], [1], [0, 0, 1, 1], [], []>} : vector<64x9xf32>, vector<9x16xf32>, vector<64x16xf32> -> vector<64x16xf32>
    %c0_14 = arith.constant 0 : index
    %c0_15 = arith.constant 0 : index
    %13 = vector.load %arg4[%c0_14, %c0_15] : memref<1x16xf32, #tpu.memory_space<vmem>>, vector<1x16xf32>
    %14 = vector.broadcast %13 : vector<1x16xf32> to vector<64x16xf32>
    %15 = arith.addf %12, %14 : vector<64x16xf32>
    %cst_16 = arith.constant 0.000000e+00 : f32
    %16 = vector.broadcast %cst_16 : f32 to vector<64x16xf32>
    %17 = arith.maximumf %15, %16 : vector<64x16xf32>
    %c0_17 = arith.constant 0 : index
    %c0_18 = arith.constant 0 : index
    %18 = vector.load %arg5[%c0_17, %c0_18] : memref<32x64xf32, #tpu.memory_space<vmem>>, vector<32x64xf32>
    %cst_19 = arith.constant dense<0.000000e+00> : vector<32x16xf32>
    %19 = tpu.matmul %18, %17, %cst_19 {dimension_numbers = #tpu.dot_dimension_numbers<[1], [0], [0], [1], [0, 0, 1, 1], [], []>} : vector<32x64xf32>, vector<64x16xf32>, vector<32x16xf32> -> vector<32x16xf32>
    %c0_20 = arith.constant 0 : index
    %c0_21 = arith.constant 0 : index
    %20 = vector.load %arg6[%c0_20, %c0_21] : memref<32x32xf32, #tpu.memory_space<vmem>>, vector<32x32xf32>
    %c0_22 = arith.constant 0 : index
    %c0_23 = arith.constant 0 : index
    %21 = vector.load %arg16[%c0_22, %c0_23] : memref<32x48xf32, #tpu.memory_space<vmem>>, vector<32x16xf32>
    tpu.vector_store %arg16[%c0_22, %c0_23], %19 {strides = array<i32>} : memref<32x48xf32, #tpu.memory_space<vmem>>, vector<32x16xf32>,
    %cst_24 = arith.constant dense<0.000000e+00> : vector<32x16xf32>
    %22 = tpu.matmul %20, %19, %cst_24 {dimension_numbers = #tpu.dot_dimension_numbers<[1], [0], [0], [1], [0, 0, 1, 1], [], []>} : vector<32x32xf32>, vector<32x16xf32>, vector<32x16xf32> -> vector<32x16xf32>
    %c0_25 = arith.constant 0 : index
    %c16 = arith.constant 16 : index
    %23 = vector.load %arg16[%c0_25, %c16] : memref<32x48xf32, #tpu.memory_space<vmem>>, vector<32x16xf32>
    tpu.vector_store %arg16[%c0_25, %c16], %22 {strides = array<i32>} : memref<32x48xf32, #tpu.memory_space<vmem>>, vector<32x16xf32>,
    %cst_26 = arith.constant dense<0.000000e+00> : vector<32x16xf32>
    %24 = tpu.matmul %20, %22, %cst_26 {dimension_numbers = #tpu.dot_dimension_numbers<[1], [0], [0], [1], [0, 0, 1, 1], [], []>} : vector<32x32xf32>, vector<32x16xf32>, vector<32x16xf32> -> vector<32x16xf32>
    %cst_27 = arith.constant 2.000000e+00 : f32
    %25 = vector.broadcast %cst_27 : f32 to vector<32x16xf32>
    %26 = arith.mulf %25, %24 : vector<32x16xf32>
    %27 = arith.subf %26, %19 : vector<32x16xf32>
    %c0_28 = arith.constant 0 : index
    %c32 = arith.constant 32 : index
    %28 = vector.load %arg16[%c0_28, %c32] : memref<32x48xf32, #tpu.memory_space<vmem>>, vector<32x16xf32>
    tpu.vector_store %arg16[%c0_28, %c32], %27 {strides = array<i32>} : memref<32x48xf32, #tpu.memory_space<vmem>>, vector<32x16xf32>,
    %c0_29 = arith.constant 0 : index
    %c0_30 = arith.constant 0 : index
    %29 = vector.load %arg16[%c0_29, %c0_30] : memref<32x48xf32, #tpu.memory_space<vmem>>, vector<32x48xf32>
    %c0_31 = arith.constant 0 : index
    %c0_32 = arith.constant 0 : index
    %30 = vector.load %arg7[%c0_31, %c0_32] : memref<48x32xf32, #tpu.memory_space<vmem>>, vector<48x32xf32>
    %cst_33 = arith.constant dense<0.000000e+00> : vector<32x32xf32>
    %31 = tpu.matmul %29, %30, %cst_33 {dimension_numbers = #tpu.dot_dimension_numbers<[1], [0], [0], [1], [0, 0, 1, 1], [], []>} : vector<32x48xf32>, vector<48x32xf32>, vector<32x32xf32> -> vector<32x32xf32>
    %c0_34 = arith.constant 0 : index
    %c0_35 = arith.constant 0 : index
    %32 = vector.load %arg8[%c0_34, %c0_35] : memref<1x32xf32, #tpu.memory_space<vmem>>, vector<1x32xf32>
    %33 = vector.broadcast %32 : vector<1x32xf32> to vector<32x32xf32>
    %34 = arith.addf %31, %33 : vector<32x32xf32>
    %cst_36 = arith.constant 0.000000e+00 : f32
    %35 = vector.broadcast %cst_36 : f32 to vector<32x32xf32>
    %36 = arith.maximumf %34, %35 : vector<32x32xf32>
    %c0_37 = arith.constant 0 : index
    %c0_38 = arith.constant 0 : index
    %37 = vector.load %arg9[%c0_37, %c0_38] : memref<16x32xf32, #tpu.memory_space<vmem>>, vector<16x32xf32>
    %cst_39 = arith.constant dense<0.000000e+00> : vector<16x32xf32>
    %38 = tpu.matmul %37, %36, %cst_39 {dimension_numbers = #tpu.dot_dimension_numbers<[1], [0], [0], [1], [0, 0, 1, 1], [], []>} : vector<16x32xf32>, vector<32x32xf32>, vector<16x32xf32> -> vector<16x32xf32>
    %c0_40 = arith.constant 0 : index
    %c0_41 = arith.constant 0 : index
    %39 = vector.load %arg17[%c0_40, %c0_41] : memref<16x32xf32, #tpu.memory_space<vmem>>, vector<16x32xf32>
    tpu.vector_store %arg17[%c0_40, %c0_41], %38 {strides = array<i32>} : memref<16x32xf32, #tpu.memory_space<vmem>>, vector<16x32xf32>,
    %c0_42 = arith.constant 0 : index
    %c0_43 = arith.constant 0 : index
    %40 = vector.load %arg17[%c0_42, %c0_43] : memref<16x32xf32, #tpu.memory_space<vmem>>, vector<1x32xf32>
    %c0_44 = arith.constant 0 : index
    %c0_45 = arith.constant 0 : index
    %41 = vector.load %arg18[%c0_44, %c0_45] : memref<2x256xf32, #tpu.memory_space<vmem>>, vector<1x32xf32>
    tpu.vector_store %arg18[%c0_44, %c0_45], %40 {strides = array<i32>} : memref<2x256xf32, #tpu.memory_space<vmem>>, vector<1x32xf32>,
    %c1 = arith.constant 1 : index
    %c0_46 = arith.constant 0 : index
    %42 = vector.load %arg17[%c1, %c0_46] : memref<16x32xf32, #tpu.memory_space<vmem>>, vector<1x32xf32>
    %c0_47 = arith.constant 0 : index
    %c32_48 = arith.constant 32 : index
    %43 = vector.load %arg18[%c0_47, %c32_48] : memref<2x256xf32, #tpu.memory_space<vmem>>, vector<1x32xf32>
    tpu.vector_store %arg18[%c0_47, %c32_48], %42 {strides = array<i32>} : memref<2x256xf32, #tpu.memory_space<vmem>>, vector<1x32xf32>,
    %c2 = arith.constant 2 : index
    %c0_49 = arith.constant 0 : index
    %44 = vector.load %arg17[%c2, %c0_49] : memref<16x32xf32, #tpu.memory_space<vmem>>, vector<1x32xf32>
    %c0_50 = arith.constant 0 : index
    %c64 = arith.constant 64 : index
    %45 = vector.load %arg18[%c0_50, %c64] : memref<2x256xf32, #tpu.memory_space<vmem>>, vector<1x32xf32>
    tpu.vector_store %arg18[%c0_50, %c64], %44 {strides = array<i32>} : memref<2x256xf32, #tpu.memory_space<vmem>>, vector<1x32xf32>,
    %c3_51 = arith.constant 3 : index
    %c0_52 = arith.constant 0 : index
    %46 = vector.load %arg17[%c3_51, %c0_52] : memref<16x32xf32, #tpu.memory_space<vmem>>, vector<1x32xf32>
    %c0_53 = arith.constant 0 : index
    %c96 = arith.constant 96 : index
    %47 = vector.load %arg18[%c0_53, %c96] : memref<2x256xf32, #tpu.memory_space<vmem>>, vector<1x32xf32>
    tpu.vector_store %arg18[%c0_53, %c96], %46 {strides = array<i32>} : memref<2x256xf32, #tpu.memory_space<vmem>>, vector<1x32xf32>,
    %c4 = arith.constant 4 : index
    %c0_54 = arith.constant 0 : index
    %48 = vector.load %arg17[%c4, %c0_54] : memref<16x32xf32, #tpu.memory_space<vmem>>, vector<1x32xf32>
    %c0_55 = arith.constant 0 : index
    %c128 = arith.constant 128 : index
    %49 = vector.load %arg18[%c0_55, %c128] : memref<2x256xf32, #tpu.memory_space<vmem>>, vector<1x32xf32>
    tpu.vector_store %arg18[%c0_55, %c128], %48 {strides = array<i32>} : memref<2x256xf32, #tpu.memory_space<vmem>>, vector<1x32xf32>,
    %c5 = arith.constant 5 : index
    %c0_56 = arith.constant 0 : index
    %50 = vector.load %arg17[%c5, %c0_56] : memref<16x32xf32, #tpu.memory_space<vmem>>, vector<1x32xf32>
    %c0_57 = arith.constant 0 : index
    %c160 = arith.constant 160 : index
    %51 = vector.load %arg18[%c0_57, %c160] : memref<2x256xf32, #tpu.memory_space<vmem>>, vector<1x32xf32>
    tpu.vector_store %arg18[%c0_57, %c160], %50 {strides = array<i32>} : memref<2x256xf32, #tpu.memory_space<vmem>>, vector<1x32xf32>,
    %c6_58 = arith.constant 6 : index
    %c0_59 = arith.constant 0 : index
    %52 = vector.load %arg17[%c6_58, %c0_59] : memref<16x32xf32, #tpu.memory_space<vmem>>, vector<1x32xf32>
    %c0_60 = arith.constant 0 : index
    %c192 = arith.constant 192 : index
    %53 = vector.load %arg18[%c0_60, %c192] : memref<2x256xf32, #tpu.memory_space<vmem>>, vector<1x32xf32>
    tpu.vector_store %arg18[%c0_60, %c192], %52 {strides = array<i32>} : memref<2x256xf32, #tpu.memory_space<vmem>>, vector<1x32xf32>,
    %c7 = arith.constant 7 : index
    %c0_61 = arith.constant 0 : index
    %54 = vector.load %arg17[%c7, %c0_61] : memref<16x32xf32, #tpu.memory_space<vmem>>, vector<1x32xf32>
    %c0_62 = arith.constant 0 : index
    %c224 = arith.constant 224 : index
    %55 = vector.load %arg18[%c0_62, %c224] : memref<2x256xf32, #tpu.memory_space<vmem>>, vector<1x32xf32>
    tpu.vector_store %arg18[%c0_62, %c224], %54 {strides = array<i32>} : memref<2x256xf32, #tpu.memory_space<vmem>>, vector<1x32xf32>,
    %c8 = arith.constant 8 : index
    %c0_63 = arith.constant 0 : index
    %56 = vector.load %arg17[%c8, %c0_63] : memref<16x32xf32, #tpu.memory_space<vmem>>, vector<1x32xf32>
    %c1_64 = arith.constant 1 : index
    %c0_65 = arith.constant 0 : index
    %57 = vector.load %arg18[%c1_64, %c0_65] : memref<2x256xf32, #tpu.memory_space<vmem>>, vector<1x32xf32>
    tpu.vector_store %arg18[%c1_64, %c0_65], %56 {strides = array<i32>} : memref<2x256xf32, #tpu.memory_space<vmem>>, vector<1x32xf32>,
    %c9 = arith.constant 9 : index
    %c0_66 = arith.constant 0 : index
    %58 = vector.load %arg17[%c9, %c0_66] : memref<16x32xf32, #tpu.memory_space<vmem>>, vector<1x32xf32>
    %c1_67 = arith.constant 1 : index
    %c32_68 = arith.constant 32 : index
    %59 = vector.load %arg18[%c1_67, %c32_68] : memref<2x256xf32, #tpu.memory_space<vmem>>, vector<1x32xf32>
    tpu.vector_store %arg18[%c1_67, %c32_68], %58 {strides = array<i32>} : memref<2x256xf32, #tpu.memory_space<vmem>>, vector<1x32xf32>,
    %c10 = arith.constant 10 : index
    %c0_69 = arith.constant 0 : index
    %60 = vector.load %arg17[%c10, %c0_69] : memref<16x32xf32, #tpu.memory_space<vmem>>, vector<1x32xf32>
    %c1_70 = arith.constant 1 : index
    %c64_71 = arith.constant 64 : index
    %61 = vector.load %arg18[%c1_70, %c64_71] : memref<2x256xf32, #tpu.memory_space<vmem>>, vector<1x32xf32>
    tpu.vector_store %arg18[%c1_70, %c64_71], %60 {strides = array<i32>} : memref<2x256xf32, #tpu.memory_space<vmem>>, vector<1x32xf32>,
    %c11 = arith.constant 11 : index
    %c0_72 = arith.constant 0 : index
    %62 = vector.load %arg17[%c11, %c0_72] : memref<16x32xf32, #tpu.memory_space<vmem>>, vector<1x32xf32>
    %c1_73 = arith.constant 1 : index
    %c96_74 = arith.constant 96 : index
    %63 = vector.load %arg18[%c1_73, %c96_74] : memref<2x256xf32, #tpu.memory_space<vmem>>, vector<1x32xf32>
    tpu.vector_store %arg18[%c1_73, %c96_74], %62 {strides = array<i32>} : memref<2x256xf32, #tpu.memory_space<vmem>>, vector<1x32xf32>,
    %c12 = arith.constant 12 : index
    %c0_75 = arith.constant 0 : index
    %64 = vector.load %arg17[%c12, %c0_75] : memref<16x32xf32, #tpu.memory_space<vmem>>, vector<1x32xf32>
    %c1_76 = arith.constant 1 : index
    %c128_77 = arith.constant 128 : index
    %65 = vector.load %arg18[%c1_76, %c128_77] : memref<2x256xf32, #tpu.memory_space<vmem>>, vector<1x32xf32>
    tpu.vector_store %arg18[%c1_76, %c128_77], %64 {strides = array<i32>} : memref<2x256xf32, #tpu.memory_space<vmem>>, vector<1x32xf32>,
    %c13 = arith.constant 13 : index
    %c0_78 = arith.constant 0 : index
    %66 = vector.load %arg17[%c13, %c0_78] : memref<16x32xf32, #tpu.memory_space<vmem>>, vector<1x32xf32>
    %c1_79 = arith.constant 1 : index
    %c160_80 = arith.constant 160 : index
    %67 = vector.load %arg18[%c1_79, %c160_80] : memref<2x256xf32, #tpu.memory_space<vmem>>, vector<1x32xf32>
    tpu.vector_store %arg18[%c1_79, %c160_80], %66 {strides = array<i32>} : memref<2x256xf32, #tpu.memory_space<vmem>>, vector<1x32xf32>,
    %c14 = arith.constant 14 : index
    %c0_81 = arith.constant 0 : index
    %68 = vector.load %arg17[%c14, %c0_81] : memref<16x32xf32, #tpu.memory_space<vmem>>, vector<1x32xf32>
    %c1_82 = arith.constant 1 : index
    %c192_83 = arith.constant 192 : index
    %69 = vector.load %arg18[%c1_82, %c192_83] : memref<2x256xf32, #tpu.memory_space<vmem>>, vector<1x32xf32>
    tpu.vector_store %arg18[%c1_82, %c192_83], %68 {strides = array<i32>} : memref<2x256xf32, #tpu.memory_space<vmem>>, vector<1x32xf32>,
    %c15 = arith.constant 15 : index
    %c0_84 = arith.constant 0 : index
    %70 = vector.load %arg17[%c15, %c0_84] : memref<16x32xf32, #tpu.memory_space<vmem>>, vector<1x32xf32>
    %c1_85 = arith.constant 1 : index
    %c224_86 = arith.constant 224 : index
    %71 = vector.load %arg18[%c1_85, %c224_86] : memref<2x256xf32, #tpu.memory_space<vmem>>, vector<1x32xf32>
    tpu.vector_store %arg18[%c1_85, %c224_86], %70 {strides = array<i32>} : memref<2x256xf32, #tpu.memory_space<vmem>>, vector<1x32xf32>,
    %c0_87 = arith.constant 0 : index
    %c0_88 = arith.constant 0 : index
    %72 = vector.load %arg18[%c0_87, %c0_88] : memref<2x256xf32, #tpu.memory_space<vmem>>, vector<2x256xf32>
    %c0_89 = arith.constant 0 : index
    %c0_90 = arith.constant 0 : index
    %73 = vector.load %arg10[%c0_89, %c0_90] : memref<256x128xf32, #tpu.memory_space<vmem>>, vector<256x128xf32>
    %cst_91 = arith.constant dense<0.000000e+00> : vector<2x128xf32>
    %74 = tpu.matmul %72, %73, %cst_91 {dimension_numbers = #tpu.dot_dimension_numbers<[1], [0], [0], [1], [0, 0, 1, 1], [], []>} : vector<2x256xf32>, vector<256x128xf32>, vector<2x128xf32> -> vector<2x128xf32>
    %c0_92 = arith.constant 0 : index
    %c0_93 = arith.constant 0 : index
    %75 = vector.load %arg11[%c0_92, %c0_93] : memref<1x128xf32, #tpu.memory_space<vmem>>, vector<1x128xf32>
    %76 = vector.broadcast %75 : vector<1x128xf32> to vector<2x128xf32>
    %77 = arith.addf %74, %76 : vector<2x128xf32>
    %cst_94 = arith.constant 0.000000e+00 : f32
    %78 = vector.broadcast %cst_94 : f32 to vector<2x128xf32>
    %79 = arith.maximumf %77, %78 : vector<2x128xf32>
    %c0_95 = arith.constant 0 : index
    %c0_96 = arith.constant 0 : index
    %80 = vector.load %arg12[%c0_95, %c0_96] : memref<128x4xf32, #tpu.memory_space<vmem>>, vector<128x4xf32>
    %cst_97 = arith.constant dense<0.000000e+00> : vector<2x4xf32>
    %81 = tpu.matmul %79, %80, %cst_97 {dimension_numbers = #tpu.dot_dimension_numbers<[1], [0], [0], [1], [0, 0, 1, 1], [], []>} : vector<2x128xf32>, vector<128x4xf32>, vector<2x4xf32> -> vector<2x4xf32>
    %c0_98 = arith.constant 0 : index
    %c0_99 = arith.constant 0 : index
    %82 = vector.load %arg13[%c0_98, %c0_99] : memref<1x4xf32, #tpu.memory_space<vmem>>, vector<1x4xf32>
    %83 = vector.broadcast %82 : vector<1x4xf32> to vector<2x4xf32>
    %84 = arith.addf %81, %83 : vector<2x4xf32>
    %c0_100 = arith.constant 0 : index
    %c0_101 = arith.constant 0 : index
    %85 = vector.load %arg14[%c0_100, %c0_101] : memref<2x4xf32, #tpu.memory_space<vmem>>, vector<2x4xf32>
    tpu.vector_store %arg14[%c0_100, %c0_101], %84 {strides = array<i32>} : memref<2x4xf32, #tpu.memory_space<vmem>>, vector<2x4xf32>,
    return
  }
  func.func @transform_0(%arg0: i32) -> (i32, i32) {
    %c0_i32 = arith.constant 0 : i32
    %c0_i32_0 = arith.constant 0 : i32
    %c0_i32_1 = arith.constant 0 : i32
    return %c0_i32, %c0_i32_0 : i32, i32
  }
  func.func @transform_1(%arg0: i32) -> (i32, i32) {
    %c0_i32 = arith.constant 0 : i32
    %c0_i32_0 = arith.constant 0 : i32
    %c0_i32_1 = arith.constant 0 : i32
    return %c0_i32, %c0_i32_0 : i32, i32
  }
  func.func @transform_2(%arg0: i32) -> (i32, i32) {
    %c0_i32 = arith.constant 0 : i32
    %c0_i32_0 = arith.constant 0 : i32
    %c0_i32_1 = arith.constant 0 : i32
    return %c0_i32, %c0_i32_0 : i32, i32
  }
  func.func @transform_3(%arg0: i32) -> (i32, i32) {
    %c0_i32 = arith.constant 0 : i32
    %c0_i32_0 = arith.constant 0 : i32
    %c0_i32_1 = arith.constant 0 : i32
    return %c0_i32, %c0_i32_0 : i32, i32
  }
  func.func @transform_4(%arg0: i32) -> (i32, i32) {
    %c0_i32 = arith.constant 0 : i32
    %c0_i32_0 = arith.constant 0 : i32
    %c0_i32_1 = arith.constant 0 : i32
    return %c0_i32, %c0_i32_0 : i32, i32
  }
  func.func @transform_5(%arg0: i32) -> (i32, i32) {
    %c0_i32 = arith.constant 0 : i32
    %c0_i32_0 = arith.constant 0 : i32
    %c0_i32_1 = arith.constant 0 : i32
    return %c0_i32, %c0_i32_0 : i32, i32
  }
  func.func @transform_6(%arg0: i32) -> (i32, i32) {
    %c0_i32 = arith.constant 0 : i32
    %c0_i32_0 = arith.constant 0 : i32
    %c0_i32_1 = arith.constant 0 : i32
    return %c0_i32, %c0_i32_0 : i32, i32
  }
  func.func @transform_7(%arg0: i32) -> (i32, i32) {
    %c0_i32 = arith.constant 0 : i32
    %c0_i32_0 = arith.constant 0 : i32
    %c0_i32_1 = arith.constant 0 : i32
    return %c0_i32, %c0_i32_0 : i32, i32
  }
  func.func @transform_8(%arg0: i32) -> (i32, i32) {
    %c0_i32 = arith.constant 0 : i32
    %c0_i32_0 = arith.constant 0 : i32
    %c0_i32_1 = arith.constant 0 : i32
    return %c0_i32, %c0_i32_0 : i32, i32
  }
  func.func @transform_9(%arg0: i32) -> (i32, i32) {
    %c0_i32 = arith.constant 0 : i32
    %c0_i32_0 = arith.constant 0 : i32
    %c0_i32_1 = arith.constant 0 : i32
    return %c0_i32, %c0_i32_0 : i32, i32
  }
  func.func @transform_10(%arg0: i32) -> (i32, i32) {
    %c0_i32 = arith.constant 0 : i32
    %c0_i32_0 = arith.constant 0 : i32
    %c0_i32_1 = arith.constant 0 : i32
    return %c0_i32, %c0_i32_0 : i32, i32
  }
  func.func @transform_11(%arg0: i32) -> (i32, i32) {
    %c0_i32 = arith.constant 0 : i32
    %c0_i32_0 = arith.constant 0 : i32
    %c0_i32_1 = arith.constant 0 : i32
    return %c0_i32, %c0_i32_0 : i32, i32
  }
  func.func @transform_12(%arg0: i32) -> (i32, i32) {
    %c0_i32 = arith.constant 0 : i32
    %c0_i32_0 = arith.constant 0 : i32
    %c0_i32_1 = arith.constant 0 : i32
    return %c0_i32, %c0_i32_0 : i32, i32
  }
  func.func @transform_13(%arg0: i32) -> (i32, i32) {
    %c0_i32 = arith.constant 0 : i32
    %c0_i32_0 = arith.constant 0 : i32
    %c0_i32_1 = arith.constant 0 : i32
    return %c0_i32, %c0_i32_0 : i32, i32
  }
}

</mosaic_0001>

<llo_original>
// kernel: tpu_custom_call.1
$region0: #{tpu_custom_call.1}
  #allocation0 [shape = 'u32[]', space=smem, size = 0x4, offset = 0x4, fixed_abs, tag = 'smem constant byte address 0x4 - core index']
  #allocation1 [shape = 'u32[144,128]{1,0:T(1,128)}', space=vmem, size = 0x12000, scoped, tag = 'internal scratch']
  #allocation2 [shape = 'f32[64,9]{1,0:T(8,128)}', space=vmem, size = 0x8000, scoped, tag = 'scratch operand']
  #allocation3 [shape = 'f32[32,48]{1,0:T(8,128)}', space=vmem, size = 0x4000, scoped, tag = 'scratch operand']
  #allocation4 [shape = 'f32[16,32]{1,0:T(8,128)}', space=vmem, size = 0x2000, scoped, tag = 'scratch operand']
  #allocation5 [shape = 'f32[2,256]{1,0:T(2,128)}', space=vmem, size = 0x800, scoped, tag = 'scratch operand']
  %s0 = inlined_call_operand.vmem [shape: f32[64,3], index: 0, kind: input, shape index: {}]
  %s1 = inlined_call_operand.hbm [shape: f32[64,64], index: 1, kind: input, shape index: {}]
  %s2 = inlined_call_operand.vmem [shape: f32[9,16], index: 2, kind: input, shape index: {}]
  %s3 = inlined_call_operand.vmem [shape: f32[1,16], index: 3, kind: input, shape index: {}]
  %s4 = inlined_call_operand.vmem [shape: f32[32,64], index: 4, kind: input, shape index: {}]
  %s5 = inlined_call_operand.hbm [shape: f32[32,32], index: 5, kind: input, shape index: {}]
  %s6 = inlined_call_operand.vmem [shape: f32[48,32], index: 6, kind: input, shape index: {}]
  %s7 = inlined_call_operand.vmem [shape: f32[1,32], index: 7, kind: input, shape index: {}]
  %s8 = inlined_call_operand.hbm [shape: f32[16,32], index: 8, kind: input, shape index: {}]
  %s9 = inlined_call_operand.vmem [shape: f32[256,128], index: 9, kind: input, shape index: {}]
  %s10 = inlined_call_operand.vmem [shape: f32[1,128], index: 10, kind: input, shape index: {}]
  %s11 = inlined_call_operand.vmem [shape: f32[128,4], index: 11, kind: input, shape index: {}]
  %s12 = inlined_call_operand.vmem [shape: f32[1,4], index: 12, kind: input, shape index: {}]
  %s13 = inlined_call_operand.hbm [shape: f32[2,4], index: 13, kind: output, shape index: {}]
  %s14 = sld [smem:[#allocation0]]
  $region74: #{tpu_custom_call.1} parent=0
    _
  %s16 = ssub.s32 1, %s14
  %s17 = scalar_select 0, %s16, %s14
  $region1: #{tpu_custom_call.1} parent=0
    #allocation6 [shape = 'u8[32768]{0}', space=vmem, size = 0x8000, scoped, tag = 'input window, operand 1, single buffered']
    #allocation7 [shape = 's32[1]{0}', space=sflag, size = 0x4, scoped, tag = 'scoped memory for tpu_custom_call.1']
    #allocation8 [shape = 's32[1]{0}', space=sflag, size = 0x4, scoped, tag = 'scoped memory for tpu_custom_call.1']
    #allocation9 [shape = 'u8[16384]{0}', space=vmem, size = 0x4000, scoped, tag = 'input window, operand 5, single buffered']
    #allocation10 [shape = 's32[1]{0}', space=sflag, size = 0x4, scoped, tag = 'scoped memory for tpu_custom_call.1']
    #allocation11 [shape = 'u8[8192]{0}', space=vmem, size = 0x2000, scoped, tag = 'input window, operand 8, single buffered']
    #allocation12 [shape = 'u8[1024]{0}', space=vmem, size = 0x400, scoped, tag = 'output window, operand 0, single buffered']
    %18 = vsyncpa [#allocation7], 0
    %19 = vsyncpa [#allocation10], 0
    %20 = vsyncpa [#allocation8], 0
    // Predicated region
    $region2: #{tpu_custom_call.1} parent=1 // pred_check
      _
    $region3: #{tpu_custom_call.1} parent=1 // pred_check_branch
      %22 = sbr.rel (0) target = $region5
    $region4: #{tpu_custom_call.1} parent=1 // pred_region
      _
    $region5: #{tpu_custom_call.1} parent=1 // pred_fallthru
      _
    // Predicated region
    $region6: #{tpu_custom_call.1} parent=1 // pred_check
      _
    $region7: #{tpu_custom_call.1} parent=1 // pred_check_branch
      %24 = sbr.rel (0) target = $region9
    $region8: #{tpu_custom_call.1} parent=1 // pred_region
      %s26 = ssub.s32 1024, 1024
      %27 = vsyncadd [#allocation7], %s26
      %s28 = sshll.u32 [#allocation6], 4
      %s29 = int_to_ptr.vmem [resolvable:$true] %s28
      %34 = dma.hbm_to_vmem [thread:$0]  %s1, 1024, %s29, [#allocation7], 128, 128, 8
    $region9: #{tpu_custom_call.1} parent=1 // pred_fallthru
      _
    // Predicated region
    $region10: #{tpu_custom_call.1} parent=1 // pred_check
      _
    $region11: #{tpu_custom_call.1} parent=1 // pred_check_branch
      %36 = sbr.rel (0) target = $region13
    $region12: #{tpu_custom_call.1} parent=1 // pred_region
      _
    $region13: #{tpu_custom_call.1} parent=1 // pred_fallthru
      _
    // Predicated region
    $region14: #{tpu_custom_call.1} parent=1 // pred_check
      _
    $region15: #{tpu_custom_call.1} parent=1 // pred_check_branch
      %38 = sbr.rel (0) target = $region17
    $region16: #{tpu_custom_call.1} parent=1 // pred_region
      _
    $region17: #{tpu_custom_call.1} parent=1 // pred_fallthru
      _
    // Predicated region
    $region18: #{tpu_custom_call.1} parent=1 // pred_check
      _
    $region19: #{tpu_custom_call.1} parent=1 // pred_check_branch
      %40 = sbr.rel (0) target = $region21
    $region20: #{tpu_custom_call.1} parent=1 // pred_region
      _
    $region21: #{tpu_custom_call.1} parent=1 // pred_fallthru
      _
    // Predicated region
    $region22: #{tpu_custom_call.1} parent=1 // pred_check
      _
    $region23: #{tpu_custom_call.1} parent=1 // pred_check_branch
      %42 = sbr.rel (0) target = $region25
    $region24: #{tpu_custom_call.1} parent=1 // pred_region
      %s44 = ssub.s32 512, 512
      %45 = vsyncadd [#allocation10], %s44
      %s46 = sshll.u32 [#allocation9], 4
      %s47 = int_to_ptr.vmem [resolvable:$true] %s46
      %52 = dma.hbm_to_vmem [thread:$0]  %s5, 512, %s47, [#allocation10], 128, 128, 8
    $region25: #{tpu_custom_call.1} parent=1 // pred_fallthru
      _
    // Predicated region
    $region26: #{tpu_custom_call.1} parent=1 // pred_check
      _
    $region27: #{tpu_custom_call.1} parent=1 // pred_check_branch
      %54 = sbr.rel (0) target = $region29
    $region28: #{tpu_custom_call.1} parent=1 // pred_region
      _
    $region29: #{tpu_custom_call.1} parent=1 // pred_fallthru
      _
    // Predicated region
    $region30: #{tpu_custom_call.1} parent=1 // pred_check
      _
    $region31: #{tpu_custom_call.1} parent=1 // pred_check_branch
      %56 = sbr.rel (0) target = $region33
    $region32: #{tpu_custom_call.1} parent=1 // pred_region
      _
    $region33: #{tpu_custom_call.1} parent=1 // pred_fallthru
      _
    // Predicated region
    $region34: #{tpu_custom_call.1} parent=1 // pred_check
      _
    $region35: #{tpu_custom_call.1} parent=1 // pred_check_branch
      %58 = sbr.rel (0) target = $region37
    $region36: #{tpu_custom_call.1} parent=1 // pred_region
      %s60 = ssub.s32 256, 256
      %61 = vsyncadd [#allocation10], %s60
      %s62 = sshll.u32 [#allocation11], 4
      %s63 = int_to_ptr.vmem [resolvable:$true] %s62
      %68 = dma.hbm_to_vmem [thread:$0]  %s8, 256, %s63, [#allocation10], 128, 128, 8
    $region37: #{tpu_custom_call.1} parent=1 // pred_fallthru
      _
    // Predicated region
    $region38: #{tpu_custom_call.1} parent=1 // pred_check
      _
    $region39: #{tpu_custom_call.1} parent=1 // pred_check_branch
      %70 = sbr.rel (0) target = $region41
    $region40: #{tpu_custom_call.1} parent=1 // pred_region
      _
    $region41: #{tpu_custom_call.1} parent=1 // pred_fallthru
      _
    // Predicated region
    $region42: #{tpu_custom_call.1} parent=1 // pred_check
      _
    $region43: #{tpu_custom_call.1} parent=1 // pred_check_branch
      %72 = sbr.rel (0) target = $region45
    $region44: #{tpu_custom_call.1} parent=1 // pred_region
      _
    $region45: #{tpu_custom_call.1} parent=1 // pred_fallthru
      _
    // Predicated region
    $region46: #{tpu_custom_call.1} parent=1 // pred_check
      _
    $region47: #{tpu_custom_call.1} parent=1 // pred_check_branch
      %74 = sbr.rel (0) target = $region49
    $region48: #{tpu_custom_call.1} parent=1 // pred_region
      _
    $region49: #{tpu_custom_call.1} parent=1 // pred_fallthru
      _
    // Predicated region
    $region50: #{tpu_custom_call.1} parent=1 // pred_check
      _
    $region51: #{tpu_custom_call.1} parent=1 // pred_check_branch
      %76 = sbr.rel (0) target = $region53
    $region52: #{tpu_custom_call.1} parent=1 // pred_region
      _
    $region53: #{tpu_custom_call.1} parent=1 // pred_fallthru
      _
    // Predicated region
    $region54: #{tpu_custom_call.1} parent=1 // pred_check
      _
    $region55: #{tpu_custom_call.1} parent=1 // pred_check_branch
      %78 = sbr.rel (0) target = $region57
    $region56: #{tpu_custom_call.1} parent=1 // pred_region
      %79 = dma.done [#allocation7], 1024
    $region57: #{tpu_custom_call.1} parent=1 // pred_fallthru
      _
    // Predicated region
    $region58: #{tpu_custom_call.1} parent=1 // pred_check
      _
    $region59: #{tpu_custom_call.1} parent=1 // pred_check_branch
      %81 = sbr.rel (0) target = $region61
    $region60: #{tpu_custom_call.1} parent=1 // pred_region
      %82 = dma.done [#allocation10], 512
    $region61: #{tpu_custom_call.1} parent=1 // pred_fallthru
      _
    // Predicated region
    $region62: #{tpu_custom_call.1} parent=1 // pred_check
      _
    $region63: #{tpu_custom_call.1} parent=1 // pred_check_branch
      %84 = sbr.rel (0) target = $region65
    $region64: #{tpu_custom_call.1} parent=1 // pred_region
      %85 = dma.done [#allocation10], 256
    $region65: #{tpu_custom_call.1} parent=1 // pred_fallthru
      _
    %v86 = vld [vmem:[%s0] sm:$0xff]
    %v87 = vld [vmem:[%s0 + $0x8] sm:$0xff]
    %v88 = vld [vmem:[%s0 + $0x10] sm:$0xff]
    %v89 = vld [vmem:[%s0 + $0x18] sm:$0xff]
    %v90 = vld [vmem:[%s0 + $0x20] sm:$0xff]
    %v91 = vld [vmem:[%s0 + $0x28] sm:$0xff]
    %v92 = vld [vmem:[%s0 + $0x30] sm:$0xff]
    %v93 = vld [vmem:[%s0 + $0x38] sm:$0xff]
    %v94 = vld [vmem:[#allocation6] sm:$0xff]
    %v95 = vld [vmem:[#allocation6 + $0x8] sm:$0xff]
    %v96 = vld [vmem:[#allocation6 + $0x10] sm:$0xff]
    %v97 = vld [vmem:[#allocation6 + $0x18] sm:$0xff]
    %v98 = vld [vmem:[#allocation6 + $0x20] sm:$0xff]
    %v99 = vld [vmem:[#allocation6 + $0x28] sm:$0xff]
    %v100 = vld [vmem:[#allocation6 + $0x30] sm:$0xff]
    %v101 = vld [vmem:[#allocation6 + $0x38] sm:$0xff]
    %vm102 = vcmask 23552
    %103 = vst.msk [vmem:[#allocation2] sm:$0xff] %vm102, %v86
    %104 = vst.msk [vmem:[#allocation2 + $0x8] sm:$0xff] %vm102, %v87
    %105 = vst.msk [vmem:[#allocation2 + $0x10] sm:$0xff] %vm102, %v88
    %106 = vst.msk [vmem:[#allocation2 + $0x18] sm:$0xff] %vm102, %v89
    %107 = vst.msk [vmem:[#allocation2 + $0x20] sm:$0xff] %vm102, %v90
    %108 = vst.msk [vmem:[#allocation2 + $0x28] sm:$0xff] %vm102, %v91
    %109 = vst.msk [vmem:[#allocation2 + $0x30] sm:$0xff] %vm102, %v92
    %110 = vst.msk [vmem:[#allocation2 + $0x38] sm:$0xff] %vm102, %v93
    %vm111 = vcmask 523264
    %v113 = vsel %vm111, %v94, 0
    %v116 = vsel %vm111, %v95, 0
    %v119 = vsel %vm111, %v96, 0
    %v122 = vsel %vm111, %v97, 0
    %v125 = vsel %vm111, %v98, 0
    %v128 = vsel %vm111, %v99, 0
    %v131 = vsel %vm111, %v100, 0
    %v134 = vsel %vm111, %v101, 0
    %136 = vmatprep.subr.mxu0 0.0
    %137 = vmatpush1.msra.mxu0 %v86
    %138 = vmatprep.subr.mxu0 0.0
    %139 = vmatpush1.msra.mxu0 %v87
    %140 = vmatprep.subr.mxu0 0.0
    %141 = vmatpush1.msra.mxu0 %v88
    %142 = vmatprep.subr.mxu0 0.0
    %143 = vmatpush1.msra.mxu0 %v89
    %144 = vmatprep.subr.mxu0 0.0
    %145 = vmatpush1.msra.mxu0 %v90
    %146 = vmatprep.subr.mxu0 0.0
    %147 = vmatpush1.msra.mxu0 %v91
    %148 = vmatprep.subr.mxu0 0.0
    %149 = vmatpush1.msra.mxu0 %v92
    %150 = vmatprep.subr.mxu0 0.0
    %151 = vmatpush1.msra.mxu0 %v93
    %152 = vmatprep.subr.mxu0 0.0
    %153 = vmatpush1.msra.mxu0 0.0
    %154 = vmatprep.subr.mxu0 0.0
    %155 = vmatpush1.msra.mxu0 0.0
    %156 = vmatprep.subr.mxu0 0.0
    %157 = vmatpush1.msra.mxu0 0.0
    %158 = vmatprep.subr.mxu0 0.0
    %159 = vmatpush1.msra.mxu0 0.0
    %160 = vmatprep.subr.mxu0 0.0
    %161 = vmatpush1.msra.mxu0 0.0
    %162 = vmatprep.subr.mxu0 0.0
    %163 = vmatpush1.msra.mxu0 0.0
    %164 = vmatprep.subr.mxu0 0.0
    %165 = vmatpush1.msra.mxu0 0.0
    %166 = vmatprep.subr.mxu0 0.0
    %167 = vmatpush1.msra.mxu0 0.0
    %168 = vmatprep.subr.mxu0 0.0
    %169 = vmatpush1.msra.mxu0 0.0
    %170 = vmatprep.subr.mxu0 0.0
    %171 = vmatpush1.msra.mxu0 0.0
    %172 = vmatprep.subr.mxu0 0.0
    %173 = vmatpush1.msra.mxu0 0.0
    %174 = vmatprep.subr.mxu0 0.0
    %175 = vmatpush1.msra.mxu0 0.0
    %176 = vmatprep.subr.mxu0 0.0
    %177 = vmatpush1.msra.mxu0 0.0
    %178 = vmatprep.subr.mxu0 0.0
    %179 = vmatpush1.msra.mxu0 0.0
    %180 = vmatprep.subr.mxu0 0.0
    %181 = vmatpush1.msra.mxu0 0.0
    %182 = vmatprep.subr.mxu0 0.0
    %183 = vmatpush1.msra.mxu0 0.0
    %184 = vmatprep.subr.mxu0 0.0
    %185 = vmatpush1.msra.mxu0 0.0
    %186 = vmatprep.subr.mxu0 0.0
    %187 = vmatpush1.msra.mxu0 0.0
    %188 = vmatprep.subr.mxu0 0.0
    %189 = vmatpush1.msra.mxu0 0.0
    %190 = vmatprep.subr.mxu0 0.0
    %191 = vmatpush1.msra.mxu0 0.0
    %192 = vmatprep.subr.mxu0 0.0
    %193 = vmatpush1.msra.mxu0 0.0
    %194 = vmatprep.subr.mxu0 0.0
    %195 = vmatpush1.msra.mxu0 0.0
    %196 = vmatprep.subr.mxu0 0.0
    %197 = vmatpush1.msra.mxu0 0.0
    %198 = vmatprep.subr.mxu0 0.0
    %199 = vmatpush1.msra.mxu0 0.0
    %200 = vmatprep.mubr.f32.mxu0 0.0
    %201 = vmatmul.mubr.f32.gmra.mrb[0].mxu0 %v113
    %v202 = vpop.f32.mrb[0].mxu0
    %v203 = vadd.f32 0.0, %v202
    %v204 = vpop.f32.mrb[0].mxu0
    %205 = vmatprep.mubr.f32.mxu0 0.0
    %206 = vmatmul.mubr.f32.gmra.mrb[0].mxu0 %v116
    %v207 = vpop.f32.mrb[0].mxu0
    %v208 = vadd.f32 0.0, %v207
    %v209 = vpop.f32.mrb[0].mxu0
    %210 = vmatprep.mubr.f32.mxu0 0.0
    %211 = vmatmul.mubr.f32.gmra.mrb[0].mxu0 %v119
    %v212 = vpop.f32.mrb[0].mxu0
    %v213 = vadd.f32 0.0, %v212
    %v214 = vpop.f32.mrb[0].mxu0
    %215 = vmatprep.mubr.f32.mxu0 0.0
    %216 = vmatmul.mubr.f32.gmra.mrb[0].mxu0 %v122
    %v217 = vpop.f32.mrb[0].mxu0
    %v218 = vadd.f32 0.0, %v217
    %v219 = vpop.f32.mrb[0].mxu0
    %220 = vmatprep.mubr.f32.mxu0 0.0
    %221 = vmatmul.mubr.f32.gmra.mrb[0].mxu0 %v125
    %v222 = vpop.f32.mrb[0].mxu0
    %v223 = vadd.f32 0.0, %v222
    %v224 = vpop.f32.mrb[0].mxu0
    %225 = vmatprep.mubr.f32.mxu0 0.0
    %226 = vmatmul.mubr.f32.gmra.mrb[0].mxu0 %v128
    %v227 = vpop.f32.mrb[0].mxu0
    %v228 = vadd.f32 0.0, %v227
    %v229 = vpop.f32.mrb[0].mxu0
    %230 = vmatprep.mubr.f32.mxu0 0.0
    %231 = vmatmul.mubr.f32.gmra.mrb[0].mxu0 %v131
    %v232 = vpop.f32.mrb[0].mxu0
    %v233 = vadd.f32 0.0, %v232
    %v234 = vpop.f32.mrb[0].mxu0
    %235 = vmatprep.mubr.f32.mxu0 0.0
    %236 = vmatmul.mubr.f32.gmra.mrb[0].mxu0 %v134
    %v237 = vpop.f32.mrb[0].mxu0
    %v238 = vadd.f32 0.0, %v237
    %v239 = vpop.f32.mrb[0].mxu0
    %240 = vdwg.mxu0
    %249 = vrot.lane.b32.xlu0 %v203, 3
    %v250 = vpop.permute.xlu0 %249
    %251 = vrot.lane.b32.xlu0 %v208, 3
    %v252 = vpop.permute.xlu0 %251
    %253 = vrot.lane.b32.xlu0 %v213, 3
    %v254 = vpop.permute.xlu0 %253
    %255 = vrot.lane.b32.xlu0 %v218, 3
    %v256 = vpop.permute.xlu0 %255
    %257 = vrot.lane.b32.xlu0 %v223, 3
    %v258 = vpop.permute.xlu0 %257
    %259 = vrot.lane.b32.xlu0 %v228, 3
    %v260 = vpop.permute.xlu0 %259
    %261 = vrot.lane.b32.xlu0 %v233, 3
    %v262 = vpop.permute.xlu0 %261
    %263 = vrot.lane.b32.xlu0 %v238, 3
    %v264 = vpop.permute.xlu0 %263
    %vm273 = vcmask 48152
    %274 = vst.msk [vmem:[#allocation2] sm:$0xff] %vm273, %v250
    %275 = vst.msk [vmem:[#allocation2 + $0x8] sm:$0xff] %vm273, %v252
    %276 = vst.msk [vmem:[#allocation2 + $0x10] sm:$0xff] %vm273, %v254
    %277 = vst.msk [vmem:[#allocation2 + $0x18] sm:$0xff] %vm273, %v256
    %278 = vst.msk [vmem:[#allocation2 + $0x20] sm:$0xff] %vm273, %v258
    %279 = vst.msk [vmem:[#allocation2 + $0x28] sm:$0xff] %vm273, %v260
    %280 = vst.msk [vmem:[#allocation2 + $0x30] sm:$0xff] %vm273, %v262
    %281 = vst.msk [vmem:[#allocation2 + $0x38] sm:$0xff] %vm273, %v264
    %282 = vmatprep.subr.mxu0 0.0
    %283 = vmatpush1.msra.mxu0 %v203
    %284 = vmatprep.subr.mxu0 0.0
    %285 = vmatpush1.msra.mxu0 %v208
    %286 = vmatprep.subr.mxu0 0.0
    %287 = vmatpush1.msra.mxu0 %v213
    %288 = vmatprep.subr.mxu0 0.0
    %289 = vmatpush1.msra.mxu0 %v218
    %290 = vmatprep.subr.mxu0 0.0
    %291 = vmatpush1.msra.mxu0 %v223
    %292 = vmatprep.subr.mxu0 0.0
    %293 = vmatpush1.msra.mxu0 %v228
    %294 = vmatprep.subr.mxu0 0.0
    %295 = vmatpush1.msra.mxu0 %v233
    %296 = vmatprep.subr.mxu0 0.0
    %297 = vmatpush1.msra.mxu0 %v238
    %298 = vmatprep.subr.mxu0 0.0
    %299 = vmatpush1.msra.mxu0 0.0
    %300 = vmatprep.subr.mxu0 0.0
    %301 = vmatpush1.msra.mxu0 0.0
    %302 = vmatprep.subr.mxu0 0.0
    %303 = vmatpush1.msra.mxu0 0.0
    %304 = vmatprep.subr.mxu0 0.0
    %305 = vmatpush1.msra.mxu0 0.0
    %306 = vmatprep.subr.mxu0 0.0
    %307 = vmatpush1.msra.mxu0 0.0
    %308 = vmatprep.subr.mxu0 0.0
    %309 = vmatpush1.msra.mxu0 0.0
    %310 = vmatprep.subr.mxu0 0.0
    %311 = vmatpush1.msra.mxu0 0.0
    %312 = vmatprep.subr.mxu0 0.0
    %313 = vmatpush1.msra.mxu0 0.0
    %314 = vmatprep.subr.mxu0 0.0
    %315 = vmatpush1.msra.mxu0 0.0
    %316 = vmatprep.subr.mxu0 0.0
    %317 = vmatpush1.msra.mxu0 0.0
    %318 = vmatprep.subr.mxu0 0.0
    %319 = vmatpush1.msra.mxu0 0.0
    %320 = vmatprep.subr.mxu0 0.0
    %321 = vmatpush1.msra.mxu0 0.0
    %322 = vmatprep.subr.mxu0 0.0
    %323 = vmatpush1.msra.mxu0 0.0
    %324 = vmatprep.subr.mxu0 0.0
    %325 = vmatpush1.msra.mxu0 0.0
    %326 = vmatprep.subr.mxu0 0.0
    %327 = vmatpush1.msra.mxu0 0.0
    %328 = vmatprep.subr.mxu0 0.0
    %329 = vmatpush1.msra.mxu0 0.0
    %330 = vmatprep.subr.mxu0 0.0
    %331 = vmatpush1.msra.mxu0 0.0
    %332 = vmatprep.subr.mxu0 0.0
    %333 = vmatpush1.msra.mxu0 0.0
    %334 = vmatprep.subr.mxu0 0.0
    %335 = vmatpush1.msra.mxu0 0.0
    %336 = vmatprep.subr.mxu0 0.0
    %337 = vmatpush1.msra.mxu0 0.0
    %338 = vmatprep.subr.mxu0 0.0
    %339 = vmatpush1.msra.mxu0 0.0
    %340 = vmatprep.subr.mxu0 0.0
    %341 = vmatpush1.msra.mxu0 0.0
    %342 = vmatprep.subr.mxu0 0.0
    %343 = vmatpush1.msra.mxu0 0.0
    %344 = vmatprep.subr.mxu0 0.0
    %345 = vmatpush1.msra.mxu0 0.0
    %346 = vmatprep.mubr.f32.mxu0 0.0
    %347 = vmatmul.mubr.f32.gmra.mrb[0].mxu0 %v113
    %v348 = vpop.f32.mrb[0].mxu0
    %v349 = vadd.f32 0.0, %v348
    %v350 = vpop.f32.mrb[0].mxu0
    %351 = vmatprep.mubr.f32.mxu0 0.0
    %352 = vmatmul.mubr.f32.gmra.mrb[0].mxu0 %v116
    %v353 = vpop.f32.mrb[0].mxu0
    %v354 = vadd.f32 0.0, %v353
    %v355 = vpop.f32.mrb[0].mxu0
    %356 = vmatprep.mubr.f32.mxu0 0.0
    %357 = vmatmul.mubr.f32.gmra.mrb[0].mxu0 %v119
    %v358 = vpop.f32.mrb[0].mxu0
    %v359 = vadd.f32 0.0, %v358
    %v360 = vpop.f32.mrb[0].mxu0
    %361 = vmatprep.mubr.f32.mxu0 0.0
    %362 = vmatmul.mubr.f32.gmra.mrb[0].mxu0 %v122
    %v363 = vpop.f32.mrb[0].mxu0
    %v364 = vadd.f32 0.0, %v363
    %v365 = vpop.f32.mrb[0].mxu0
    %366 = vmatprep.mubr.f32.mxu0 0.0
    %367 = vmatmul.mubr.f32.gmra.mrb[0].mxu0 %v125
    %v368 = vpop.f32.mrb[0].mxu0
    %v369 = vadd.f32 0.0, %v368
    %v370 = vpop.f32.mrb[0].mxu0
    %371 = vmatprep.mubr.f32.mxu0 0.0
    %372 = vmatmul.mubr.f32.gmra.mrb[0].mxu0 %v128
    %v373 = vpop.f32.mrb[0].mxu0
    %v374 = vadd.f32 0.0, %v373
    %v375 = vpop.f32.mrb[0].mxu0
    %376 = vmatprep.mubr.f32.mxu0 0.0
    %377 = vmatmul.mubr.f32.gmra.mrb[0].mxu0 %v131
    %v378 = vpop.f32.mrb[0].mxu0
    %v379 = vadd.f32 0.0, %v378
    %v380 = vpop.f32.mrb[0].mxu0
    %381 = vmatprep.mubr.f32.mxu0 0.0
    %382 = vmatmul.mubr.f32.gmra.mrb[0].mxu0 %v134
    %v383 = vpop.f32.mrb[0].mxu0
    %v384 = vadd.f32 0.0, %v383
    %v385 = vpop.f32.mrb[0].mxu0
    %386 = vdwg.mxu0
    %v387 = vmul.f32 %v349, 2.0
    %v388 = vmul.f32 %v354, 2.0
    %v389 = vmul.f32 %v359, 2.0
    %v390 = vmul.f32 %v364, 2.0
    %v391 = vmul.f32 %v369, 2.0
    %v392 = vmul.f32 %v374, 2.0
    %v393 = vmul.f32 %v379, 2.0
    %v394 = vmul.f32 %v384, 2.0
    %v395 = vsub.f32 %v387, %v86
    %v396 = vsub.f32 %v388, %v87
    %v397 = vsub.f32 %v389, %v88
    %v398 = vsub.f32 %v390, %v89
    %v399 = vsub.f32 %v391, %v90
    %v400 = vsub.f32 %v392, %v91
    %v401 = vsub.f32 %v393, %v92
    %v402 = vsub.f32 %v394, %v93
    %411 = vrot.lane.b32.xlu0 %v395, 6
    %v412 = vpop.permute.xlu0 %411
    %413 = vrot.lane.b32.xlu0 %v396, 6
    %v414 = vpop.permute.xlu0 %413
    %415 = vrot.lane.b32.xlu0 %v397, 6
    %v416 = vpop.permute.xlu0 %415
    %417 = vrot.lane.b32.xlu0 %v398, 6
    %v418 = vpop.permute.xlu0 %417
    %419 = vrot.lane.b32.xlu0 %v399, 6
    %v420 = vpop.permute.xlu0 %419
    %421 = vrot.lane.b32.xlu0 %v400, 6
    %v422 = vpop.permute.xlu0 %421
    %423 = vrot.lane.b32.xlu0 %v401, 6
    %v424 = vpop.permute.xlu0 %423
    %425 = vrot.lane.b32.xlu0 %v402, 6
    %v426 = vpop.permute.xlu0 %425
    %vm435 = vcmask 72752
    %436 = vst.msk [vmem:[#allocation2] sm:$0xff] %vm435, %v412
    %437 = vst.msk [vmem:[#allocation2 + $0x8] sm:$0xff] %vm435, %v414
    %438 = vst.msk [vmem:[#allocation2 + $0x10] sm:$0xff] %vm435, %v416
    %439 = vst.msk [vmem:[#allocation2 + $0x18] sm:$0xff] %vm435, %v418
    %440 = vst.msk [vmem:[#allocation2 + $0x20] sm:$0xff] %vm435, %v420
    %441 = vst.msk [vmem:[#allocation2 + $0x28] sm:$0xff] %vm435, %v422
    %442 = vst.msk [vmem:[#allocation2 + $0x30] sm:$0xff] %vm435, %v424
    %443 = vst.msk [vmem:[#allocation2 + $0x38] sm:$0xff] %vm435, %v426
    %v444 = vld [vmem:[#allocation2] sm:$0xff]
    %v445 = vld [vmem:[#allocation2 + $0x8] sm:$0xff]
    %v446 = vld [vmem:[#allocation2 + $0x10] sm:$0xff]
    %v447 = vld [vmem:[#allocation2 + $0x18] sm:$0xff]
    %v448 = vld [vmem:[#allocation2 + $0x20] sm:$0xff]
    %v449 = vld [vmem:[#allocation2 + $0x28] sm:$0xff]
    %v450 = vld [vmem:[#allocation2 + $0x30] sm:$0xff]
    %v451 = vld [vmem:[#allocation2 + $0x38] sm:$0xff]
    %v452 = vld [vmem:[%s2] sm:$0xff]
    %v453 = vld [vmem:[%s2 + $0x8] sm:$0x1]
    %v454 = vld [vmem:[%s3] sm:$0x1]
    %v456 = vlaneseq
    %v457 = vshrl.u32 %v456, 7
    %v458 = vsub.s32 0, %v457
    %v459 = vrot.slane %v454, %v458
    %vm461 = vcmask 72704
    %v463 = vsel %vm461, %v444, 0
    %v466 = vsel %vm461, %v445, 0
    %v469 = vsel %vm461, %v446, 0
    %v472 = vsel %vm461, %v447, 0
    %v475 = vsel %vm461, %v448, 0
    %v478 = vsel %vm461, %v449, 0
    %v481 = vsel %vm461, %v450, 0
    %v484 = vsel %vm461, %v451, 0
    %vm486 = vcmask 1040384
    %v488 = vsel %vm486, %v453, 0
    %490 = vmatprep.subr.mxu0 0.0
    %491 = vmatpush1.msra.mxu0 %v452
    %492 = vmatprep.subr.mxu0 0.0
    %493 = vmatpush1.msra.mxu0 %v488
    %494 = vmatprep.subr.mxu0 0.0
    %495 = vmatpush1.msra.mxu0 0.0
    %496 = vmatprep.subr.mxu0 0.0
    %497 = vmatpush1.msra.mxu0 0.0
    %498 = vmatprep.subr.mxu0 0.0
    %499 = vmatpush1.msra.mxu0 0.0
    %500 = vmatprep.subr.mxu0 0.0
    %501 = vmatpush1.msra.mxu0 0.0
    %502 = vmatprep.subr.mxu0 0.0
    %503 = vmatpush1.msra.mxu0 0.0
    %504 = vmatprep.subr.mxu0 0.0
    %505 = vmatpush1.msra.mxu0 0.0
    %506 = vmatprep.subr.mxu0 0.0
    %507 = vmatpush1.msra.mxu0 0.0
    %508 = vmatprep.subr.mxu0 0.0
    %509 = vmatpush1.msra.mxu0 0.0
    %510 = vmatprep.subr.mxu0 0.0
    %511 = vmatpush1.msra.mxu0 0.0
    %512 = vmatprep.subr.mxu0 0.0
    %513 = vmatpush1.msra.mxu0 0.0
    %514 = vmatprep.subr.mxu0 0.0
    %515 = vmatpush1.msra.mxu0 0.0
    %516 = vmatprep.subr.mxu0 0.0
    %517 = vmatpush1.msra.mxu0 0.0
    %518 = vmatprep.subr.mxu0 0.0
    %519 = vmatpush1.msra.mxu0 0.0
    %520 = vmatprep.subr.mxu0 0.0
    %521 = vmatpush1.msra.mxu0 0.0
    %522 = vmatprep.subr.mxu0 0.0
    %523 = vmatpush1.msra.mxu0 0.0
    %524 = vmatprep.subr.mxu0 0.0
    %525 = vmatpush1.msra.mxu0 0.0
    %526 = vmatprep.subr.mxu0 0.0
    %527 = vmatpush1.msra.mxu0 0.0
    %528 = vmatprep.subr.mxu0 0.0
    %529 = vmatpush1.msra.mxu0 0.0
    %530 = vmatprep.subr.mxu0 0.0
    %531 = vmatpush1.msra.mxu0 0.0
    %532 = vmatprep.subr.mxu0 0.0
    %533 = vmatpush1.msra.mxu0 0.0
    %534 = vmatprep.subr.mxu0 0.0
    %535 = vmatpush1.msra.mxu0 0.0
    %536 = vmatprep.subr.mxu0 0.0
    %537 = vmatpush1.msra.mxu0 0.0
    %538 = vmatprep.subr.mxu0 0.0
    %539 = vmatpush1.msra.mxu0 0.0
    %540 = vmatprep.subr.mxu0 0.0
    %541 = vmatpush1.msra.mxu0 0.0
    %542 = vmatprep.subr.mxu0 0.0
    %543 = vmatpush1.msra.mxu0 0.0
    %544 = vmatprep.subr.mxu0 0.0
    %545 = vmatpush1.msra.mxu0 0.0
    %546 = vmatprep.subr.mxu0 0.0
    %547 = vmatpush1.msra.mxu0 0.0
    %548 = vmatprep.subr.mxu0 0.0
    %549 = vmatpush1.msra.mxu0 0.0
    %550 = vmatprep.subr.mxu0 0.0
    %551 = vmatpush1.msra.mxu0 0.0
    %552 = vmatprep.subr.mxu0 0.0
    %553 = vmatpush1.msra.mxu0 0.0
    %554 = vmatprep.mubr.f32.mxu0 0.0
    %555 = vmatmul.mubr.f32.gmra.mrb[0].mxu0 %v463
    %v556 = vpop.f32.mrb[0].mxu0
    %v557 = vadd.f32 %v459, %v556
    %v558 = vpop.f32.mrb[0].mxu0
    %559 = vmatprep.mubr.f32.mxu0 0.0
    %560 = vmatmul.mubr.f32.gmra.mrb[0].mxu0 %v466
    %v561 = vpop.f32.mrb[0].mxu0
    %v562 = vadd.f32 %v459, %v561
    %v563 = vpop.f32.mrb[0].mxu0
    %564 = vmatprep.mubr.f32.mxu0 0.0
    %565 = vmatmul.mubr.f32.gmra.mrb[0].mxu0 %v469
    %v566 = vpop.f32.mrb[0].mxu0
    %v567 = vadd.f32 %v459, %v566
    %v568 = vpop.f32.mrb[0].mxu0
    %569 = vmatprep.mubr.f32.mxu0 0.0
    %570 = vmatmul.mubr.f32.gmra.mrb[0].mxu0 %v472
    %v571 = vpop.f32.mrb[0].mxu0
    %v572 = vadd.f32 %v459, %v571
    %v573 = vpop.f32.mrb[0].mxu0
    %574 = vmatprep.mubr.f32.mxu0 0.0
    %575 = vmatmul.mubr.f32.gmra.mrb[0].mxu0 %v475
    %v576 = vpop.f32.mrb[0].mxu0
    %v577 = vadd.f32 %v459, %v576
    %v578 = vpop.f32.mrb[0].mxu0
    %579 = vmatprep.mubr.f32.mxu0 0.0
    %580 = vmatmul.mubr.f32.gmra.mrb[0].mxu0 %v478
    %v581 = vpop.f32.mrb[0].mxu0
    %v582 = vadd.f32 %v459, %v581
    %v583 = vpop.f32.mrb[0].mxu0
    %584 = vmatprep.mubr.f32.mxu0 0.0
    %585 = vmatmul.mubr.f32.gmra.mrb[0].mxu0 %v481
    %v586 = vpop.f32.mrb[0].mxu0
    %v587 = vadd.f32 %v459, %v586
    %v588 = vpop.f32.mrb[0].mxu0
    %589 = vmatprep.mubr.f32.mxu0 0.0
    %590 = vmatmul.mubr.f32.gmra.mrb[0].mxu0 %v484
    %v591 = vpop.f32.mrb[0].mxu0
    %v592 = vadd.f32 %v459, %v591
    %v593 = vpop.f32.mrb[0].mxu0
    %594 = vdwg.mxu0
    %v595 = vmax.f32 %v557, 0.0
    %v596 = vmax.f32 %v562, 0.0
    %v597 = vmax.f32 %v567, 0.0
    %v598 = vmax.f32 %v572, 0.0
    %v599 = vmax.f32 %v577, 0.0
    %v600 = vmax.f32 %v582, 0.0
    %v601 = vmax.f32 %v587, 0.0
    %v602 = vmax.f32 %v592, 0.0
    %v603 = vld [vmem:[%s4] sm:$0xff]
    %v604 = vld [vmem:[%s4 + $0x8] sm:$0xff]
    %v605 = vld [vmem:[%s4 + $0x10] sm:$0xff]
    %v606 = vld [vmem:[%s4 + $0x18] sm:$0xff]
    %v608 = vsel %vm111, %v603, 0
    %v611 = vsel %vm111, %v604, 0
    %v614 = vsel %vm111, %v605, 0
    %v617 = vsel %vm111, %v606, 0
    %619 = vmatprep.subr.mxu0 0.0
    %620 = vmatpush1.msra.mxu0 %v595
    %621 = vmatprep.subr.mxu0 0.0
    %622 = vmatpush1.msra.mxu0 %v596
    %623 = vmatprep.subr.mxu0 0.0
    %624 = vmatpush1.msra.mxu0 %v597
    %625 = vmatprep.subr.mxu0 0.0
    %626 = vmatpush1.msra.mxu0 %v598
    %627 = vmatprep.subr.mxu0 0.0
    %628 = vmatpush1.msra.mxu0 %v599
    %629 = vmatprep.subr.mxu0 0.0
    %630 = vmatpush1.msra.mxu0 %v600
    %631 = vmatprep.subr.mxu0 0.0
    %632 = vmatpush1.msra.mxu0 %v601
    %633 = vmatprep.subr.mxu0 0.0
    %634 = vmatpush1.msra.mxu0 %v602
    %635 = vmatprep.subr.mxu0 0.0
    %636 = vmatpush1.msra.mxu0 0.0
    %637 = vmatprep.subr.mxu0 0.0
    %638 = vmatpush1.msra.mxu0 0.0
    %639 = vmatprep.subr.mxu0 0.0
    %640 = vmatpush1.msra.mxu0 0.0
    %641 = vmatprep.subr.mxu0 0.0
    %642 = vmatpush1.msra.mxu0 0.0
    %643 = vmatprep.subr.mxu0 0.0
    %644 = vmatpush1.msra.mxu0 0.0
    %645 = vmatprep.subr.mxu0 0.0
    %646 = vmatpush1.msra.mxu0 0.0
    %647 = vmatprep.subr.mxu0 0.0
    %648 = vmatpush1.msra.mxu0 0.0
    %649 = vmatprep.subr.mxu0 0.0
    %650 = vmatpush1.msra.mxu0 0.0
    %651 = vmatprep.subr.mxu0 0.0
    %652 = vmatpush1.msra.mxu0 0.0
    %653 = vmatprep.subr.mxu0 0.0
    %654 = vmatpush1.msra.mxu0 0.0
    %655 = vmatprep.subr.mxu0 0.0
    %656 = vmatpush1.msra.mxu0 0.0
    %657 = vmatprep.subr.mxu0 0.0
    %658 = vmatpush1.msra.mxu0 0.0
    %659 = vmatprep.subr.mxu0 0.0
    %660 = vmatpush1.msra.mxu0 0.0
    %661 = vmatprep.subr.mxu0 0.0
    %662 = vmatpush1.msra.mxu0 0.0
    %663 = vmatprep.subr.mxu0 0.0
    %664 = vmatpush1.msra.mxu0 0.0
    %665 = vmatprep.subr.mxu0 0.0
    %666 = vmatpush1.msra.mxu0 0.0
    %667 = vmatprep.subr.mxu0 0.0
    %668 = vmatpush1.msra.mxu0 0.0
    %669 = vmatprep.subr.mxu0 0.0
    %670 = vmatpush1.msra.mxu0 0.0
    %671 = vmatprep.subr.mxu0 0.0
    %672 = vmatpush1.msra.mxu0 0.0
    %673 = vmatprep.subr.mxu0 0.0
    %674 = vmatpush1.msra.mxu0 0.0
    %675 = vmatprep.subr.mxu0 0.0
    %676 = vmatpush1.msra.mxu0 0.0
    %677 = vmatprep.subr.mxu0 0.0
    %678 = vmatpush1.msra.mxu0 0.0
    %679 = vmatprep.subr.mxu0 0.0
    %680 = vmatpush1.msra.mxu0 0.0
    %681 = vmatprep.subr.mxu0 0.0
    %682 = vmatpush1.msra.mxu0 0.0
    %683 = vmatprep.mubr.f32.mxu0 0.0
    %684 = vmatmul.mubr.f32.gmra.mrb[0].mxu0 %v608
    %v685 = vpop.f32.mrb[0].mxu0
    %v686 = vadd.f32 0.0, %v685
    %v687 = vpop.f32.mrb[0].mxu0
    %688 = vmatprep.mubr.f32.mxu0 0.0
    %689 = vmatmul.mubr.f32.gmra.mrb[0].mxu0 %v611
    %v690 = vpop.f32.mrb[0].mxu0
    %v691 = vadd.f32 0.0, %v690
    %v692 = vpop.f32.mrb[0].mxu0
    %693 = vmatprep.mubr.f32.mxu0 0.0
    %694 = vmatmul.mubr.f32.gmra.mrb[0].mxu0 %v614
    %v695 = vpop.f32.mrb[0].mxu0
    %v696 = vadd.f32 0.0, %v695
    %v697 = vpop.f32.mrb[0].mxu0
    %698 = vmatprep.mubr.f32.mxu0 0.0
    %699 = vmatmul.mubr.f32.gmra.mrb[0].mxu0 %v617
    %v700 = vpop.f32.mrb[0].mxu0
    %v701 = vadd.f32 0.0, %v700
    %v702 = vpop.f32.mrb[0].mxu0
    %703 = vdwg.mxu0
    %v704 = vld [vmem:[#allocation9] sm:$0xff]
    %v705 = vld [vmem:[#allocation9 + $0x8] sm:$0xff]
    %v706 = vld [vmem:[#allocation9 + $0x10] sm:$0xff]
    %v707 = vld [vmem:[#allocation9 + $0x18] sm:$0xff]
    %vm708 = vcmask 130048
    %709 = vst.msk [vmem:[#allocation3] sm:$0xff] %vm708, %v686
    %710 = vst.msk [vmem:[#allocation3 + $0x8] sm:$0xff] %vm708, %v691
    %711 = vst.msk [vmem:[#allocation3 + $0x10] sm:$0xff] %vm708, %v696
    %712 = vst.msk [vmem:[#allocation3 + $0x18] sm:$0xff] %vm708, %v701
    %vm713 = vcmask 261120
    %v715 = vsel %vm713, %v704, 0
    %v718 = vsel %vm713, %v705, 0
    %v721 = vsel %vm713, %v706, 0
    %v724 = vsel %vm713, %v707, 0
    %726 = vmatprep.subr.mxu0 0.0
    %727 = vmatpush1.msra.mxu0 %v686
    %728 = vmatprep.subr.mxu0 0.0
    %729 = vmatpush1.msra.mxu0 %v691
    %730 = vmatprep.subr.mxu0 0.0
    %731 = vmatpush1.msra.mxu0 %v696
    %732 = vmatprep.subr.mxu0 0.0
    %733 = vmatpush1.msra.mxu0 %v701
    %734 = vmatprep.subr.mxu0 0.0
    %735 = vmatpush1.msra.mxu0 0.0
    %736 = vmatprep.subr.mxu0 0.0
    %737 = vmatpush1.msra.mxu0 0.0
    %738 = vmatprep.subr.mxu0 0.0
    %739 = vmatpush1.msra.mxu0 0.0
    %740 = vmatprep.subr.mxu0 0.0
    %741 = vmatpush1.msra.mxu0 0.0
    %742 = vmatprep.subr.mxu0 0.0
    %743 = vmatpush1.msra.mxu0 0.0
    %744 = vmatprep.subr.mxu0 0.0
    %745 = vmatpush1.msra.mxu0 0.0
    %746 = vmatprep.subr.mxu0 0.0
    %747 = vmatpush1.msra.mxu0 0.0
    %748 = vmatprep.subr.mxu0 0.0
    %749 = vmatpush1.msra.mxu0 0.0
    %750 = vmatprep.subr.mxu0 0.0
    %751 = vmatpush1.msra.mxu0 0.0
    %752 = vmatprep.subr.mxu0 0.0
    %753 = vmatpush1.msra.mxu0 0.0
    %754 = vmatprep.subr.mxu0 0.0
    %755 = vmatpush1.msra.mxu0 0.0
    %756 = vmatprep.subr.mxu0 0.0
    %757 = vmatpush1.msra.mxu0 0.0
    %758 = vmatprep.subr.mxu0 0.0
    %759 = vmatpush1.msra.mxu0 0.0
    %760 = vmatprep.subr.mxu0 0.0
    %761 = vmatpush1.msra.mxu0 0.0
    %762 = vmatprep.subr.mxu0 0.0
    %763 = vmatpush1.msra.mxu0 0.0
    %764 = vmatprep.subr.mxu0 0.0
    %765 = vmatpush1.msra.mxu0 0.0
    %766 = vmatprep.subr.mxu0 0.0
    %767 = vmatpush1.msra.mxu0 0.0
    %768 = vmatprep.subr.mxu0 0.0
    %769 = vmatpush1.msra.mxu0 0.0
    %770 = vmatprep.subr.mxu0 0.0
    %771 = vmatpush1.msra.mxu0 0.0
    %772 = vmatprep.subr.mxu0 0.0
    %773 = vmatpush1.msra.mxu0 0.0
    %774 = vmatprep.subr.mxu0 0.0
    %775 = vmatpush1.msra.mxu0 0.0
    %776 = vmatprep.subr.mxu0 0.0
    %777 = vmatpush1.msra.mxu0 0.0
    %778 = vmatprep.subr.mxu0 0.0
    %779 = vmatpush1.msra.mxu0 0.0
    %780 = vmatprep.subr.mxu0 0.0
    %781 = vmatpush1.msra.mxu0 0.0
    %782 = vmatprep.subr.mxu0 0.0
    %783 = vmatpush1.msra.mxu0 0.0
    %784 = vmatprep.subr.mxu0 0.0
    %785 = vmatpush1.msra.mxu0 0.0
    %786 = vmatprep.subr.mxu0 0.0
    %787 = vmatpush1.msra.mxu0 0.0
    %788 = vmatprep.subr.mxu0 0.0
    %789 = vmatpush1.msra.mxu0 0.0
    %790 = vmatprep.mubr.f32.mxu0 0.0
    %791 = vmatmul.mubr.f32.gmra.mrb[0].mxu0 %v715
    %v792 = vpop.f32.mrb[0].mxu0
    %v793 = vadd.f32 0.0, %v792
    %v794 = vpop.f32.mrb[0].mxu0
    %795 = vmatprep.mubr.f32.mxu0 0.0
    %796 = vmatmul.mubr.f32.gmra.mrb[0].mxu0 %v718
    %v797 = vpop.f32.mrb[0].mxu0
    %v798 = vadd.f32 0.0, %v797
    %v799 = vpop.f32.mrb[0].mxu0
    %800 = vmatprep.mubr.f32.mxu0 0.0
    %801 = vmatmul.mubr.f32.gmra.mrb[0].mxu0 %v721
    %v802 = vpop.f32.mrb[0].mxu0
    %v803 = vadd.f32 0.0, %v802
    %v804 = vpop.f32.mrb[0].mxu0
    %805 = vmatprep.mubr.f32.mxu0 0.0
    %806 = vmatmul.mubr.f32.gmra.mrb[0].mxu0 %v724
    %v807 = vpop.f32.mrb[0].mxu0
    %v808 = vadd.f32 0.0, %v807
    %v809 = vpop.f32.mrb[0].mxu0
    %810 = vdwg.mxu0
    %815 = vrot.lane.b32.xlu0 %v793, 16
    %v816 = vpop.permute.xlu0 %815
    %817 = vrot.lane.b32.xlu0 %v798, 16
    %v818 = vpop.permute.xlu0 %817
    %819 = vrot.lane.b32.xlu0 %v803, 16
    %v820 = vpop.permute.xlu0 %819
    %821 = vrot.lane.b32.xlu0 %v808, 16
    %v822 = vpop.permute.xlu0 %821
    %vm827 = vcmask 261248
    %828 = vst.msk [vmem:[#allocation3] sm:$0xff] %vm827, %v816
    %829 = vst.msk [vmem:[#allocation3 + $0x8] sm:$0xff] %vm827, %v818
    %830 = vst.msk [vmem:[#allocation3 + $0x10] sm:$0xff] %vm827, %v820
    %831 = vst.msk [vmem:[#allocation3 + $0x18] sm:$0xff] %vm827, %v822
    %832 = vmatprep.subr.mxu0 0.0
    %833 = vmatpush1.msra.mxu0 %v793
    %834 = vmatprep.subr.mxu0 0.0
    %835 = vmatpush1.msra.mxu0 %v798
    %836 = vmatprep.subr.mxu0 0.0
    %837 = vmatpush1.msra.mxu0 %v803
    %838 = vmatprep.subr.mxu0 0.0
    %839 = vmatpush1.msra.mxu0 %v808
    %840 = vmatprep.subr.mxu0 0.0
    %841 = vmatpush1.msra.mxu0 0.0
    %842 = vmatprep.subr.mxu0 0.0
    %843 = vmatpush1.msra.mxu0 0.0
    %844 = vmatprep.subr.mxu0 0.0
    %845 = vmatpush1.msra.mxu0 0.0
    %846 = vmatprep.subr.mxu0 0.0
    %847 = vmatpush1.msra.mxu0 0.0
    %848 = vmatprep.subr.mxu0 0.0
    %849 = vmatpush1.msra.mxu0 0.0
    %850 = vmatprep.subr.mxu0 0.0
    %851 = vmatpush1.msra.mxu0 0.0
    %852 = vmatprep.subr.mxu0 0.0
    %853 = vmatpush1.msra.mxu0 0.0
    %854 = vmatprep.subr.mxu0 0.0
    %855 = vmatpush1.msra.mxu0 0.0
    %856 = vmatprep.subr.mxu0 0.0
    %857 = vmatpush1.msra.mxu0 0.0
    %858 = vmatprep.subr.mxu0 0.0
    %859 = vmatpush1.msra.mxu0 0.0
    %860 = vmatprep.subr.mxu0 0.0
    %861 = vmatpush1.msra.mxu0 0.0
    %862 = vmatprep.subr.mxu0 0.0
    %863 = vmatpush1.msra.mxu0 0.0
    %864 = vmatprep.subr.mxu0 0.0
    %865 = vmatpush1.msra.mxu0 0.0
    %866 = vmatprep.subr.mxu0 0.0
    %867 = vmatpush1.msra.mxu0 0.0
    %868 = vmatprep.subr.mxu0 0.0
    %869 = vmatpush1.msra.mxu0 0.0
    %870 = vmatprep.subr.mxu0 0.0
    %871 = vmatpush1.msra.mxu0 0.0
    %872 = vmatprep.subr.mxu0 0.0
    %873 = vmatpush1.msra.mxu0 0.0
    %874 = vmatprep.subr.mxu0 0.0
    %875 = vmatpush1.msra.mxu0 0.0
    %876 = vmatprep.subr.mxu0 0.0
    %877 = vmatpush1.msra.mxu0 0.0
    %878 = vmatprep.subr.mxu0 0.0
    %879 = vmatpush1.msra.mxu0 0.0
    %880 = vmatprep.subr.mxu0 0.0
    %881 = vmatpush1.msra.mxu0 0.0
    %882 = vmatprep.subr.mxu0 0.0
    %883 = vmatpush1.msra.mxu0 0.0
    %884 = vmatprep.subr.mxu0 0.0
    %885 = vmatpush1.msra.mxu0 0.0
    %886 = vmatprep.subr.mxu0 0.0
    %887 = vmatpush1.msra.mxu0 0.0
    %888 = vmatprep.subr.mxu0 0.0
    %889 = vmatpush1.msra.mxu0 0.0
    %890 = vmatprep.subr.mxu0 0.0
    %891 = vmatpush1.msra.mxu0 0.0
    %892 = vmatprep.subr.mxu0 0.0
    %893 = vmatpush1.msra.mxu0 0.0
    %894 = vmatprep.subr.mxu0 0.0
    %895 = vmatpush1.msra.mxu0 0.0
    %896 = vmatprep.mubr.f32.mxu0 0.0
    %897 = vmatmul.mubr.f32.gmra.mrb[0].mxu0 %v715
    %v898 = vpop.f32.mrb[0].mxu0
    %v899 = vadd.f32 0.0, %v898
    %v900 = vpop.f32.mrb[0].mxu0
    %901 = vmatprep.mubr.f32.mxu0 0.0
    %902 = vmatmul.mubr.f32.gmra.mrb[0].mxu0 %v718
    %v903 = vpop.f32.mrb[0].mxu0
    %v904 = vadd.f32 0.0, %v903
    %v905 = vpop.f32.mrb[0].mxu0
    %906 = vmatprep.mubr.f32.mxu0 0.0
    %907 = vmatmul.mubr.f32.gmra.mrb[0].mxu0 %v721
    %v908 = vpop.f32.mrb[0].mxu0
    %v909 = vadd.f32 0.0, %v908
    %v910 = vpop.f32.mrb[0].mxu0
    %911 = vmatprep.mubr.f32.mxu0 0.0
    %912 = vmatmul.mubr.f32.gmra.mrb[0].mxu0 %v724
    %v913 = vpop.f32.mrb[0].mxu0
    %v914 = vadd.f32 0.0, %v913
    %v915 = vpop.f32.mrb[0].mxu0
    %916 = vdwg.mxu0
    %v917 = vmul.f32 %v899, 2.0
    %v918 = vmul.f32 %v904, 2.0
    %v919 = vmul.f32 %v909, 2.0
    %v920 = vmul.f32 %v914, 2.0
    %v921 = vsub.f32 %v917, %v686
    %v922 = vsub.f32 %v918, %v691
    %v923 = vsub.f32 %v919, %v696
    %v924 = vsub.f32 %v920, %v701
    %929 = vrot.lane.b32.xlu0 %v921, 32
    %v930 = vpop.permute.xlu0 %929
    %931 = vrot.lane.b32.xlu0 %v922, 32
    %v932 = vpop.permute.xlu0 %931
    %933 = vrot.lane.b32.xlu0 %v923, 32
    %v934 = vpop.permute.xlu0 %933
    %935 = vrot.lane.b32.xlu0 %v924, 32
    %v936 = vpop.permute.xlu0 %935
    %vm941 = vcmask 392448
    %942 = vst.msk [vmem:[#allocation3] sm:$0xff] %vm941, %v930
    %943 = vst.msk [vmem:[#allocation3 + $0x8] sm:$0xff] %vm941, %v932
    %944 = vst.msk [vmem:[#allocation3 + $0x10] sm:$0xff] %vm941, %v934
    %945 = vst.msk [vmem:[#allocation3 + $0x18] sm:$0xff] %vm941, %v936
    %v946 = vld [vmem:[#allocation3] sm:$0xff]
    %v947 = vld [vmem:[#allocation3 + $0x8] sm:$0xff]
    %v948 = vld [vmem:[#allocation3 + $0x10] sm:$0xff]
    %v949 = vld [vmem:[#allocation3 + $0x18] sm:$0xff]
    %v950 = vld [vmem:[%s6] sm:$0xff]
    %v951 = vld [vmem:[%s6 + $0x8] sm:$0xff]
    %v952 = vld [vmem:[%s6 + $0x10] sm:$0xff]
    %v953 = vld [vmem:[%s6 + $0x18] sm:$0xff]
    %v954 = vld [vmem:[%s6 + $0x20] sm:$0xff]
    %v955 = vld [vmem:[%s6 + $0x28] sm:$0xff]
    %v956 = vld [vmem:[%s7] sm:$0x1]
    %v958 = vlaneseq
    %v959 = vshrl.u32 %v958, 7
    %v960 = vsub.s32 0, %v959
    %v961 = vrot.slane %v956, %v960
    %vm963 = vcmask 392192
    %v965 = vsel %vm963, %v946, 0
    %v968 = vsel %vm963, %v947, 0
    %v971 = vsel %vm963, %v948, 0
    %v974 = vsel %vm963, %v949, 0
    %976 = vmatprep.subr.mxu0 0.0
    %977 = vmatpush1.msra.mxu0 %v950
    %978 = vmatprep.subr.mxu0 0.0
    %979 = vmatpush1.msra.mxu0 %v951
    %980 = vmatprep.subr.mxu0 0.0
    %981 = vmatpush1.msra.mxu0 %v952
    %982 = vmatprep.subr.mxu0 0.0
    %983 = vmatpush1.msra.mxu0 %v953
    %984 = vmatprep.subr.mxu0 0.0
    %985 = vmatpush1.msra.mxu0 %v954
    %986 = vmatprep.subr.mxu0 0.0
    %987 = vmatpush1.msra.mxu0 %v955
    %988 = vmatprep.subr.mxu0 0.0
    %989 = vmatpush1.msra.mxu0 0.0
    %990 = vmatprep.subr.mxu0 0.0
    %991 = vmatpush1.msra.mxu0 0.0
    %992 = vmatprep.subr.mxu0 0.0
    %993 = vmatpush1.msra.mxu0 0.0
    %994 = vmatprep.subr.mxu0 0.0
    %995 = vmatpush1.msra.mxu0 0.0
    %996 = vmatprep.subr.mxu0 0.0
    %997 = vmatpush1.msra.mxu0 0.0
    %998 = vmatprep.subr.mxu0 0.0
    %999 = vmatpush1.msra.mxu0 0.0
    %1000 = vmatprep.subr.mxu0 0.0
    %1001 = vmatpush1.msra.mxu0 0.0
    %1002 = vmatprep.subr.mxu0 0.0
    %1003 = vmatpush1.msra.mxu0 0.0
    %1004 = vmatprep.subr.mxu0 0.0
    %1005 = vmatpush1.msra.mxu0 0.0
    %1006 = vmatprep.subr.mxu0 0.0
    %1007 = vmatpush1.msra.mxu0 0.0
    %1008 = vmatprep.subr.mxu0 0.0
    %1009 = vmatpush1.msra.mxu0 0.0
    %1010 = vmatprep.subr.mxu0 0.0
    %1011 = vmatpush1.msra.mxu0 0.0
    %1012 = vmatprep.subr.mxu0 0.0
    %1013 = vmatpush1.msra.mxu0 0.0
    %1014 = vmatprep.subr.mxu0 0.0
    %1015 = vmatpush1.msra.mxu0 0.0
    %1016 = vmatprep.subr.mxu0 0.0
    %1017 = vmatpush1.msra.mxu0 0.0
    %1018 = vmatprep.subr.mxu0 0.0
    %1019 = vmatpush1.msra.mxu0 0.0
    %1020 = vmatprep.subr.mxu0 0.0
    %1021 = vmatpush1.msra.mxu0 0.0
    %1022 = vmatprep.subr.mxu0 0.0
    %1023 = vmatpush1.msra.mxu0 0.0
    %1024 = vmatprep.subr.mxu0 0.0
    %1025 = vmatpush1.msra.mxu0 0.0
    %1026 = vmatprep.subr.mxu0 0.0
    %1027 = vmatpush1.msra.mxu0 0.0
    %1028 = vmatprep.subr.mxu0 0.0
    %1029 = vmatpush1.msra.mxu0 0.0
    %1030 = vmatprep.subr.mxu0 0.0
    %1031 = vmatpush1.msra.mxu0 0.0
    %1032 = vmatprep.subr.mxu0 0.0
    %1033 = vmatpush1.msra.mxu0 0.0
    %1034 = vmatprep.subr.mxu0 0.0
    %1035 = vmatpush1.msra.mxu0 0.0
    %1036 = vmatprep.subr.mxu0 0.0
    %1037 = vmatpush1.msra.mxu0 0.0
    %1038 = vmatprep.subr.mxu0 0.0
    %1039 = vmatpush1.msra.mxu0 0.0
    %1040 = vmatprep.mubr.f32.mxu0 0.0
    %1041 = vmatmul.mubr.f32.gmra.mrb[0].mxu0 %v965
    %v1042 = vpop.f32.mrb[0].mxu0
    %v1043 = vadd.f32 %v961, %v1042
    %v1044 = vpop.f32.mrb[0].mxu0
    %1045 = vmatprep.mubr.f32.mxu0 0.0
    %1046 = vmatmul.mubr.f32.gmra.mrb[0].mxu0 %v968
    %v1047 = vpop.f32.mrb[0].mxu0
    %v1048 = vadd.f32 %v961, %v1047
    %v1049 = vpop.f32.mrb[0].mxu0
    %1050 = vmatprep.mubr.f32.mxu0 0.0
    %1051 = vmatmul.mubr.f32.gmra.mrb[0].mxu0 %v971
    %v1052 = vpop.f32.mrb[0].mxu0
    %v1053 = vadd.f32 %v961, %v1052
    %v1054 = vpop.f32.mrb[0].mxu0
    %1055 = vmatprep.mubr.f32.mxu0 0.0
    %1056 = vmatmul.mubr.f32.gmra.mrb[0].mxu0 %v974
    %v1057 = vpop.f32.mrb[0].mxu0
    %v1058 = vadd.f32 %v961, %v1057
    %v1059 = vpop.f32.mrb[0].mxu0
    %1060 = vdwg.mxu0
    %v1061 = vmax.f32 %v1043, 0.0
    %v1062 = vmax.f32 %v1048, 0.0
    %v1063 = vmax.f32 %v1053, 0.0
    %v1064 = vmax.f32 %v1058, 0.0
    %v1065 = vld [vmem:[#allocation11] sm:$0xff]
    %v1066 = vld [vmem:[#allocation11 + $0x8] sm:$0xff]
    %v1068 = vsel %vm713, %v1065, 0
    %v1071 = vsel %vm713, %v1066, 0
    %1073 = vmatprep.subr.mxu0 0.0
    %1074 = vmatpush1.msra.mxu0 %v1061
    %1075 = vmatprep.subr.mxu0 0.0
    %1076 = vmatpush1.msra.mxu0 %v1062
    %1077 = vmatprep.subr.mxu0 0.0
    %1078 = vmatpush1.msra.mxu0 %v1063
    %1079 = vmatprep.subr.mxu0 0.0
    %1080 = vmatpush1.msra.mxu0 %v1064
    %1081 = vmatprep.subr.mxu0 0.0
    %1082 = vmatpush1.msra.mxu0 0.0
    %1083 = vmatprep.subr.mxu0 0.0
    %1084 = vmatpush1.msra.mxu0 0.0
    %1085 = vmatprep.subr.mxu0 0.0
    %1086 = vmatpush1.msra.mxu0 0.0
    %1087 = vmatprep.subr.mxu0 0.0
    %1088 = vmatpush1.msra.mxu0 0.0
    %1089 = vmatprep.subr.mxu0 0.0
    %1090 = vmatpush1.msra.mxu0 0.0
    %1091 = vmatprep.subr.mxu0 0.0
    %1092 = vmatpush1.msra.mxu0 0.0
    %1093 = vmatprep.subr.mxu0 0.0
    %1094 = vmatpush1.msra.mxu0 0.0
    %1095 = vmatprep.subr.mxu0 0.0
    %1096 = vmatpush1.msra.mxu0 0.0
    %1097 = vmatprep.subr.mxu0 0.0
    %1098 = vmatpush1.msra.mxu0 0.0
    %1099 = vmatprep.subr.mxu0 0.0
    %1100 = vmatpush1.msra.mxu0 0.0
    %1101 = vmatprep.subr.mxu0 0.0
    %1102 = vmatpush1.msra.mxu0 0.0
    %1103 = vmatprep.subr.mxu0 0.0
    %1104 = vmatpush1.msra.mxu0 0.0
    %1105 = vmatprep.subr.mxu0 0.0
    %1106 = vmatpush1.msra.mxu0 0.0
    %1107 = vmatprep.subr.mxu0 0.0
    %1108 = vmatpush1.msra.mxu0 0.0
    %1109 = vmatprep.subr.mxu0 0.0
    %1110 = vmatpush1.msra.mxu0 0.0
    %1111 = vmatprep.subr.mxu0 0.0
    %1112 = vmatpush1.msra.mxu0 0.0
    %1113 = vmatprep.subr.mxu0 0.0
    %1114 = vmatpush1.msra.mxu0 0.0
    %1115 = vmatprep.subr.mxu0 0.0
    %1116 = vmatpush1.msra.mxu0 0.0
    %1117 = vmatprep.subr.mxu0 0.0
    %1118 = vmatpush1.msra.mxu0 0.0
    %1119 = vmatprep.subr.mxu0 0.0
    %1120 = vmatpush1.msra.mxu0 0.0
    %1121 = vmatprep.subr.mxu0 0.0
    %1122 = vmatpush1.msra.mxu0 0.0
    %1123 = vmatprep.subr.mxu0 0.0
    %1124 = vmatpush1.msra.mxu0 0.0
    %1125 = vmatprep.subr.mxu0 0.0
    %1126 = vmatpush1.msra.mxu0 0.0
    %1127 = vmatprep.subr.mxu0 0.0
    %1128 = vmatpush1.msra.mxu0 0.0
    %1129 = vmatprep.subr.mxu0 0.0
    %1130 = vmatpush1.msra.mxu0 0.0
    %1131 = vmatprep.subr.mxu0 0.0
    %1132 = vmatpush1.msra.mxu0 0.0
    %1133 = vmatprep.subr.mxu0 0.0
    %1134 = vmatpush1.msra.mxu0 0.0
    %1135 = vmatprep.subr.mxu0 0.0
    %1136 = vmatpush1.msra.mxu0 0.0
    %1137 = vmatprep.mubr.f32.mxu0 0.0
    %1138 = vmatmul.mubr.f32.gmra.mrb[0].mxu0 %v1068
    %v1139 = vpop.f32.mrb[0].mxu0
    %v1140 = vadd.f32 0.0, %v1139
    %v1141 = vpop.f32.mrb[0].mxu0
    %1142 = vmatprep.mubr.f32.mxu0 0.0
    %1143 = vmatmul.mubr.f32.gmra.mrb[0].mxu0 %v1071
    %v1144 = vpop.f32.mrb[0].mxu0
    %v1145 = vadd.f32 0.0, %v1144
    %v1146 = vpop.f32.mrb[0].mxu0
    %1147 = vdwg.mxu0
    %1148 = vst.msk [vmem:[#allocation4] sm:$0xff] %vm713, %v1140
    %1149 = vst.msk [vmem:[#allocation4 + $0x8] sm:$0xff] %vm713, %v1145
    %v1150 = vld [vmem:[#allocation4] sm:$0x1]
    %vm1151 = vcmask 253952
    %1152 = vst.msk [vmem:[#allocation5] sm:$0x1] %vm1151, %v1150
    %v1153 = vld [vmem:[#allocation4 + $0x1] sm:$0x1]
    %v1156 = vunpack.c.l.s4 1983009808
    %v1157 = vunpack.c.0.s8 %v1156
    %v1158 = vlaneseq
    %v1159 = vshrl.u32 %v1158, 7
    %v1160 = vsub.s32 %v1157, %v1159
    %v1161 = vrot.slane %v1153, %v1160
    %1162 = vrot.lane.b32.xlu0 %v1161, 32
    %v1163 = vpop.permute.xlu0 %1162
    %vm1165 = vcmask 516352
    %1166 = vst.msk [vmem:[#allocation5] sm:$0x1] %vm1165, %v1163
    %v1167 = vld [vmem:[#allocation4 + $0x2] sm:$0x1]
    %v1170 = vunpack.c.l.s4 1983009808
    %v1171 = vunpack.c.0.s8 %v1170
    %v1172 = vlaneseq
    %v1173 = vshrl.u32 %v1172, 7
    %v1174 = vsub.s32 %v1171, %v1173
    %v1175 = vrot.slane %v1167, %v1174
    %1176 = vrot.lane.b32.xlu0 %v1175, 64
    %v1177 = vpop.permute.xlu0 %1176
    %vm1179 = vcmask 778752
    %1180 = vst.msk [vmem:[#allocation5] sm:$0x1] %vm1179, %v1177
    %v1181 = vld [vmem:[#allocation4 + $0x3] sm:$0x1]
    %v1184 = vunpack.c.l.s4 1983009808
    %v1185 = vunpack.c.0.s8 %v1184
    %v1186 = vlaneseq
    %v1187 = vshrl.u32 %v1186, 7
    %v1188 = vsub.s32 %v1185, %v1187
    %v1189 = vrot.slane %v1181, %v1188
    %1190 = vrot.lane.b32.xlu0 %v1189, 96
    %v1191 = vpop.permute.xlu0 %1190
    %vm1193 = vcmask 1041152
    %1194 = vst.msk [vmem:[#allocation5] sm:$0x1] %vm1193, %v1191
    %v1195 = vld [vmem:[#allocation4 + $0x4] sm:$0x1]
    %1196 = vst.msk [vmem:[#allocation5 + $0x2] sm:$0x1] %vm1151, %v1195
    %v1197 = vld [vmem:[#allocation4 + $0x5] sm:$0x1]
    %v1200 = vunpack.c.l.s4 1983009808
    %v1201 = vunpack.c.0.s8 %v1200
    %v1202 = vlaneseq
    %v1203 = vshrl.u32 %v1202, 7
    %v1204 = vsub.s32 %v1201, %v1203
    %v1205 = vrot.slane %v1197, %v1204
    %1206 = vrot.lane.b32.xlu0 %v1205, 32
    %v1207 = vpop.permute.xlu0 %1206
    %1209 = vst.msk [vmem:[#allocation5 + $0x2] sm:$0x1] %vm1165, %v1207
    %v1210 = vld [vmem:[#allocation4 + $0x6] sm:$0x1]
    %v1213 = vunpack.c.l.s4 1983009808
    %v1214 = vunpack.c.0.s8 %v1213
    %v1215 = vlaneseq
    %v1216 = vshrl.u32 %v1215, 7
    %v1217 = vsub.s32 %v1214, %v1216
    %v1218 = vrot.slane %v1210, %v1217
    %1219 = vrot.lane.b32.xlu0 %v1218, 64
    %v1220 = vpop.permute.xlu0 %1219
    %1222 = vst.msk [vmem:[#allocation5 + $0x2] sm:$0x1] %vm1179, %v1220
    %v1223 = vld [vmem:[#allocation4 + $0x7] sm:$0x1]
    %v1226 = vunpack.c.l.s4 1983009808
    %v1227 = vunpack.c.0.s8 %v1226
    %v1228 = vlaneseq
    %v1229 = vshrl.u32 %v1228, 7
    %v1230 = vsub.s32 %v1227, %v1229
    %v1231 = vrot.slane %v1223, %v1230
    %1232 = vrot.lane.b32.xlu0 %v1231, 96
    %v1233 = vpop.permute.xlu0 %1232
    %1235 = vst.msk [vmem:[#allocation5 + $0x2] sm:$0x1] %vm1193, %v1233
    %v1236 = vld [vmem:[#allocation4 + $0x8] sm:$0x1]
    %1237 = vst.msk [vmem:[#allocation5 + $0x1] sm:$0x1] %vm1151, %v1236
    %v1238 = vld [vmem:[#allocation4 + $0x9] sm:$0x1]
    %v1241 = vunpack.c.l.s4 1983009808
    %v1242 = vunpack.c.0.s8 %v1241
    %v1243 = vlaneseq
    %v1244 = vshrl.u32 %v1243, 7
    %v1245 = vsub.s32 %v1242, %v1244
    %v1246 = vrot.slane %v1238, %v1245
    %1247 = vrot.lane.b32.xlu0 %v1246, 32
    %v1248 = vpop.permute.xlu0 %1247
    %1250 = vst.msk [vmem:[#allocation5 + $0x1] sm:$0x1] %vm1165, %v1248
    %v1251 = vld [vmem:[#allocation4 + $0xa] sm:$0x1]
    %v1254 = vunpack.c.l.s4 1983009808
    %v1255 = vunpack.c.0.s8 %v1254
    %v1256 = vlaneseq
    %v1257 = vshrl.u32 %v1256, 7
    %v1258 = vsub.s32 %v1255, %v1257
    %v1259 = vrot.slane %v1251, %v1258
    %1260 = vrot.lane.b32.xlu0 %v1259, 64
    %v1261 = vpop.permute.xlu0 %1260
    %1263 = vst.msk [vmem:[#allocation5 + $0x1] sm:$0x1] %vm1179, %v1261
    %v1264 = vld [vmem:[#allocation4 + $0xb] sm:$0x1]
    %v1267 = vunpack.c.l.s4 1983009808
    %v1268 = vunpack.c.0.s8 %v1267
    %v1269 = vlaneseq
    %v1270 = vshrl.u32 %v1269, 7
    %v1271 = vsub.s32 %v1268, %v1270
    %v1272 = vrot.slane %v1264, %v1271
    %1273 = vrot.lane.b32.xlu0 %v1272, 96
    %v1274 = vpop.permute.xlu0 %1273
    %1276 = vst.msk [vmem:[#allocation5 + $0x1] sm:$0x1] %vm1193, %v1274
    %v1277 = vld [vmem:[#allocation4 + $0xc] sm:$0x1]
    %1278 = vst.msk [vmem:[#allocation5 + $0x3] sm:$0x1] %vm1151, %v1277
    %v1279 = vld [vmem:[#allocation4 + $0xd] sm:$0x1]
    %v1282 = vunpack.c.l.s4 1983009808
    %v1283 = vunpack.c.0.s8 %v1282
    %v1284 = vlaneseq
    %v1285 = vshrl.u32 %v1284, 7
    %v1286 = vsub.s32 %v1283, %v1285
    %v1287 = vrot.slane %v1279, %v1286
    %1288 = vrot.lane.b32.xlu0 %v1287, 32
    %v1289 = vpop.permute.xlu0 %1288
    %1291 = vst.msk [vmem:[#allocation5 + $0x3] sm:$0x1] %vm1165, %v1289
    %v1292 = vld [vmem:[#allocation4 + $0xe] sm:$0x1]
    %v1295 = vunpack.c.l.s4 1983009808
    %v1296 = vunpack.c.0.s8 %v1295
    %v1297 = vlaneseq
    %v1298 = vshrl.u32 %v1297, 7
    %v1299 = vsub.s32 %v1296, %v1298
    %v1300 = vrot.slane %v1292, %v1299
    %1301 = vrot.lane.b32.xlu0 %v1300, 64
    %v1302 = vpop.permute.xlu0 %1301
    %1304 = vst.msk [vmem:[#allocation5 + $0x3] sm:$0x1] %vm1179, %v1302
    %v1305 = vld [vmem:[#allocation4 + $0xf] sm:$0x1]
    %v1308 = vunpack.c.l.s4 1983009808
    %v1309 = vunpack.c.0.s8 %v1308
    %v1310 = vlaneseq
    %v1311 = vshrl.u32 %v1310, 7
    %v1312 = vsub.s32 %v1309, %v1311
    %v1313 = vrot.slane %v1305, %v1312
    %1314 = vrot.lane.b32.xlu0 %v1313, 96
    %v1315 = vpop.permute.xlu0 %1314
    %1317 = vst.msk [vmem:[#allocation5 + $0x3] sm:$0x1] %vm1193, %v1315
    %v1318 = vld [vmem:[#allocation5] sm:$0xf]
    %v1319 = vld [vmem:[%s9] sm:$0xff]
    %v1320 = vld [vmem:[%s9 + $0x8] sm:$0xff]
    %v1321 = vld [vmem:[%s9 + $0x10] sm:$0xff]
    %v1322 = vld [vmem:[%s9 + $0x18] sm:$0xff]
    %v1323 = vld [vmem:[%s9 + $0x20] sm:$0xff]
    %v1324 = vld [vmem:[%s9 + $0x28] sm:$0xff]
    %v1325 = vld [vmem:[%s9 + $0x30] sm:$0xff]
    %v1326 = vld [vmem:[%s9 + $0x38] sm:$0xff]
    %v1327 = vld [vmem:[%s9 + $0x40] sm:$0xff]
    %v1328 = vld [vmem:[%s9 + $0x48] sm:$0xff]
    %v1329 = vld [vmem:[%s9 + $0x50] sm:$0xff]
    %v1330 = vld [vmem:[%s9 + $0x58] sm:$0xff]
    %v1331 = vld [vmem:[%s9 + $0x60] sm:$0xff]
    %v1332 = vld [vmem:[%s9 + $0x68] sm:$0xff]
    %v1333 = vld [vmem:[%s9 + $0x70] sm:$0xff]
    %v1334 = vld [vmem:[%s9 + $0x78] sm:$0xff]
    %v1335 = vld [vmem:[%s9 + $0x80] sm:$0xff]
    %v1336 = vld [vmem:[%s9 + $0x88] sm:$0xff]
    %v1337 = vld [vmem:[%s9 + $0x90] sm:$0xff]
    %v1338 = vld [vmem:[%s9 + $0x98] sm:$0xff]
    %v1339 = vld [vmem:[%s9 + $0xa0] sm:$0xff]
    %v1340 = vld [vmem:[%s9 + $0xa8] sm:$0xff]
    %v1341 = vld [vmem:[%s9 + $0xb0] sm:$0xff]
    %v1342 = vld [vmem:[%s9 + $0xb8] sm:$0xff]
    %v1343 = vld [vmem:[%s9 + $0xc0] sm:$0xff]
    %v1344 = vld [vmem:[%s9 + $0xc8] sm:$0xff]
    %v1345 = vld [vmem:[%s9 + $0xd0] sm:$0xff]
    %v1346 = vld [vmem:[%s9 + $0xd8] sm:$0xff]
    %v1347 = vld [vmem:[%s9 + $0xe0] sm:$0xff]
    %v1348 = vld [vmem:[%s9 + $0xe8] sm:$0xff]
    %v1349 = vld [vmem:[%s9 + $0xf0] sm:$0xff]
    %v1350 = vld [vmem:[%s9 + $0xf8] sm:$0xff]
    %v1351 = vld [vmem:[%s10] sm:$0x1]
    %v1353 = vlaneseq
    %v1354 = vshrl.u32 %v1353, 7
    %v1355 = vsub.s32 0, %v1354
    %v1356 = vrot.slane %v1351, %v1355
    %v1360 = vunpack.c.l.s4 1983009808
    %v1361 = vunpack.c.0.s8 %v1360
    %v1362 = vlaneseq
    %v1363 = vshrl.u32 %v1362, 7
    %v1364 = vsub.s32 %v1361, %v1363
    %v1365 = vrot.slane %v1318, %v1364
    %v1366 = vcombine.high %v1365, %v1365
    %1369 = vmatprep.subr.mxu0 0.0
    %1370 = vmatpush1.msra.mxu0 %v1319
    %1371 = vmatprep.subr.mxu0 0.0
    %1372 = vmatpush1.msra.mxu0 %v1320
    %1373 = vmatprep.subr.mxu0 0.0
    %1374 = vmatpush1.msra.mxu0 %v1321
    %1375 = vmatprep.subr.mxu0 0.0
    %1376 = vmatpush1.msra.mxu0 %v1322
    %1377 = vmatprep.subr.mxu0 0.0
    %1378 = vmatpush1.msra.mxu0 %v1323
    %1379 = vmatprep.subr.mxu0 0.0
    %1380 = vmatpush1.msra.mxu0 %v1324
    %1381 = vmatprep.subr.mxu0 0.0
    %1382 = vmatpush1.msra.mxu0 %v1325
    %1383 = vmatprep.subr.mxu0 0.0
    %1384 = vmatpush1.msra.mxu0 %v1326
    %1385 = vmatprep.subr.mxu0 0.0
    %1386 = vmatpush1.msra.mxu0 %v1327
    %1387 = vmatprep.subr.mxu0 0.0
    %1388 = vmatpush1.msra.mxu0 %v1328
    %1389 = vmatprep.subr.mxu0 0.0
    %1390 = vmatpush1.msra.mxu0 %v1329
    %1391 = vmatprep.subr.mxu0 0.0
    %1392 = vmatpush1.msra.mxu0 %v1330
    %1393 = vmatprep.subr.mxu0 0.0
    %1394 = vmatpush1.msra.mxu0 %v1331
    %1395 = vmatprep.subr.mxu0 0.0
    %1396 = vmatpush1.msra.mxu0 %v1332
    %1397 = vmatprep.subr.mxu0 0.0
    %1398 = vmatpush1.msra.mxu0 %v1333
    %1399 = vmatprep.subr.mxu0 0.0
    %1400 = vmatpush1.msra.mxu0 %v1334
    %1401 = vmatprep.subr.mxu0 0.0
    %1402 = vmatpush1.msra.mxu0 %v1335
    %1403 = vmatprep.subr.mxu0 0.0
    %1404 = vmatpush1.msra.mxu0 %v1336
    %1405 = vmatprep.subr.mxu0 0.0
    %1406 = vmatpush1.msra.mxu0 %v1337
    %1407 = vmatprep.subr.mxu0 0.0
    %1408 = vmatpush1.msra.mxu0 %v1338
    %1409 = vmatprep.subr.mxu0 0.0
    %1410 = vmatpush1.msra.mxu0 %v1339
    %1411 = vmatprep.subr.mxu0 0.0
    %1412 = vmatpush1.msra.mxu0 %v1340
    %1413 = vmatprep.subr.mxu0 0.0
    %1414 = vmatpush1.msra.mxu0 %v1341
    %1415 = vmatprep.subr.mxu0 0.0
    %1416 = vmatpush1.msra.mxu0 %v1342
    %1417 = vmatprep.subr.mxu0 0.0
    %1418 = vmatpush1.msra.mxu0 %v1343
    %1419 = vmatprep.subr.mxu0 0.0
    %1420 = vmatpush1.msra.mxu0 %v1344
    %1421 = vmatprep.subr.mxu0 0.0
    %1422 = vmatpush1.msra.mxu0 %v1345
    %1423 = vmatprep.subr.mxu0 0.0
    %1424 = vmatpush1.msra.mxu0 %v1346
    %1425 = vmatprep.subr.mxu0 0.0
    %1426 = vmatpush1.msra.mxu0 %v1347
    %1427 = vmatprep.subr.mxu0 0.0
    %1428 = vmatpush1.msra.mxu0 %v1348
    %1429 = vmatprep.subr.mxu0 0.0
    %1430 = vmatpush1.msra.mxu0 %v1349
    %1431 = vmatprep.subr.mxu0 0.0
    %1432 = vmatpush1.msra.mxu0 %v1350
    %1433 = vmatprep.mubr.f32.mxu0 %v1366
    %1434 = vmatmul.mubr.f32.gmra.mrb[0].mxu0 %v1365
    %v1435 = vpop.f32.mrb[0].mxu0
    %v1436 = vadd.f32 %v1356, %v1435
    %v1437 = vpop.f32.mrb[0].mxu0
    %1438 = vdwg.mxu0
    %v1439 = vmax.f32 %v1436, 0.0
    %v1440 = vld [vmem:[%s11] sm:$0xff]
    %v1441 = vld [vmem:[%s11 + $0x8] sm:$0xff]
    %v1442 = vld [vmem:[%s11 + $0x10] sm:$0xff]
    %v1443 = vld [vmem:[%s11 + $0x18] sm:$0xff]
    %v1444 = vld [vmem:[%s11 + $0x20] sm:$0xff]
    %v1445 = vld [vmem:[%s11 + $0x28] sm:$0xff]
    %v1446 = vld [vmem:[%s11 + $0x30] sm:$0xff]
    %v1447 = vld [vmem:[%s11 + $0x38] sm:$0xff]
    %v1448 = vld [vmem:[%s11 + $0x40] sm:$0xff]
    %v1449 = vld [vmem:[%s11 + $0x48] sm:$0xff]
    %v1450 = vld [vmem:[%s11 + $0x50] sm:$0xff]
    %v1451 = vld [vmem:[%s11 + $0x58] sm:$0xff]
    %v1452 = vld [vmem:[%s11 + $0x60] sm:$0xff]
    %v1453 = vld [vmem:[%s11 + $0x68] sm:$0xff]
    %v1454 = vld [vmem:[%s11 + $0x70] sm:$0xff]
    %v1455 = vld [vmem:[%s11 + $0x78] sm:$0xff]
    %v1456 = vld [vmem:[%s12] sm:$0x1]
    %v1458 = vlaneseq
    %v1459 = vshrl.u32 %v1458, 7
    %v1460 = vsub.s32 0, %v1459
    %v1461 = vrot.slane %v1456, %v1460
    %1463 = vmatprep.subr.mxu0 0.0
    %1464 = vmatpush1.msra.mxu0 %v1440
    %1465 = vmatprep.subr.mxu0 0.0
    %1466 = vmatpush1.msra.mxu0 %v1441
    %1467 = vmatprep.subr.mxu0 0.0
    %1468 = vmatpush1.msra.mxu0 %v1442
    %1469 = vmatprep.subr.mxu0 0.0
    %1470 = vmatpush1.msra.mxu0 %v1443
    %1471 = vmatprep.subr.mxu0 0.0
    %1472 = vmatpush1.msra.mxu0 %v1444
    %1473 = vmatprep.subr.mxu0 0.0
    %1474 = vmatpush1.msra.mxu0 %v1445
    %1475 = vmatprep.subr.mxu0 0.0
    %1476 = vmatpush1.msra.mxu0 %v1446
    %1477 = vmatprep.subr.mxu0 0.0
    %1478 = vmatpush1.msra.mxu0 %v1447
    %1479 = vmatprep.subr.mxu0 0.0
    %1480 = vmatpush1.msra.mxu0 %v1448
    %1481 = vmatprep.subr.mxu0 0.0
    %1482 = vmatpush1.msra.mxu0 %v1449
    %1483 = vmatprep.subr.mxu0 0.0
    %1484 = vmatpush1.msra.mxu0 %v1450
    %1485 = vmatprep.subr.mxu0 0.0
    %1486 = vmatpush1.msra.mxu0 %v1451
    %1487 = vmatprep.subr.mxu0 0.0
    %1488 = vmatpush1.msra.mxu0 %v1452
    %1489 = vmatprep.subr.mxu0 0.0
    %1490 = vmatpush1.msra.mxu0 %v1453
    %1491 = vmatprep.subr.mxu0 0.0
    %1492 = vmatpush1.msra.mxu0 %v1454
    %1493 = vmatprep.subr.mxu0 0.0
    %1494 = vmatpush1.msra.mxu0 %v1455
    %1495 = vmatprep.subr.mxu0 0.0
    %1496 = vmatpush1.msra.mxu0 0.0
    %1497 = vmatprep.subr.mxu0 0.0
    %1498 = vmatpush1.msra.mxu0 0.0
    %1499 = vmatprep.subr.mxu0 0.0
    %1500 = vmatpush1.msra.mxu0 0.0
    %1501 = vmatprep.subr.mxu0 0.0
    %1502 = vmatpush1.msra.mxu0 0.0
    %1503 = vmatprep.subr.mxu0 0.0
    %1504 = vmatpush1.msra.mxu0 0.0
    %1505 = vmatprep.subr.mxu0 0.0
    %1506 = vmatpush1.msra.mxu0 0.0
    %1507 = vmatprep.subr.mxu0 0.0
    %1508 = vmatpush1.msra.mxu0 0.0
    %1509 = vmatprep.subr.mxu0 0.0
    %1510 = vmatpush1.msra.mxu0 0.0
    %1511 = vmatprep.subr.mxu0 0.0
    %1512 = vmatpush1.msra.mxu0 0.0
    %1513 = vmatprep.subr.mxu0 0.0
    %1514 = vmatpush1.msra.mxu0 0.0
    %1515 = vmatprep.subr.mxu0 0.0
    %1516 = vmatpush1.msra.mxu0 0.0
    %1517 = vmatprep.subr.mxu0 0.0
    %1518 = vmatpush1.msra.mxu0 0.0
    %1519 = vmatprep.subr.mxu0 0.0
    %1520 = vmatpush1.msra.mxu0 0.0
    %1521 = vmatprep.subr.mxu0 0.0
    %1522 = vmatpush1.msra.mxu0 0.0
    %1523 = vmatprep.subr.mxu0 0.0
    %1524 = vmatpush1.msra.mxu0 0.0
    %1525 = vmatprep.subr.mxu0 0.0
    %1526 = vmatpush1.msra.mxu0 0.0
    %1527 = vmatprep.mubr.f32.mxu0 0.0
    %1528 = vmatmul.mubr.f32.gmra.mrb[0].mxu0 %v1439
    %v1529 = vpop.f32.mrb[0].mxu0
    %v1530 = vadd.f32 %v1461, %v1529
    %v1531 = vpop.f32.mrb[0].mxu0
    %1532 = vdwg.mxu0
    %vm1533 = vcmask 25600
    %1534 = vst.msk [vmem:[#allocation12] sm:$0x3] %vm1533, %v1530
    // Predicated region
    $region66: #{tpu_custom_call.1} parent=1 // pred_check
      _
    $region67: #{tpu_custom_call.1} parent=1 // pred_check_branch
      %1536 = sbr.rel (0) target = $region69
    $region68: #{tpu_custom_call.1} parent=1 // pred_region
      %s1538 = ssub.s32 32, 32
      %1539 = vsyncadd [#allocation8], %s1538
      %s1541 = sshll.u32 [#allocation12], 4
      %s1542 = int_to_ptr.vmem [resolvable:$true] %s1541
      %1544 = dma.vmem_to_hbm [thread:$0]  %s1542, 32, %s13, [#allocation8]
    $region69: #{tpu_custom_call.1} parent=1 // pred_fallthru
      _
    // Predicated region
    $region70: #{tpu_custom_call.1} parent=1 // pred_check
      _
    $region71: #{tpu_custom_call.1} parent=1 // pred_check_branch
      %1546 = sbr.rel (0) target = $region73
    $region72: #{tpu_custom_call.1} parent=1 // pred_region
      %1547 = dma.done [#allocation8], 32
    $region73: #{tpu_custom_call.1} parent=1 // pred_fallthru
      _
    %1548 = vsyncpa [#allocation7], 1
    %1549 = vsyncpa [#allocation10], 1
    %1550 = vsyncpa [#allocation8], 1

</llo_original>
